<compile_context>
chip_gen: v7x
topology: tpu7x:2x2x1
jax: 0.10.0
libtpu: 0.0.40
codegen_flags: <defaults>
</compile_context>

<pallas_src>
import jax
import jax.numpy as jnp
from jax.experimental import pallas as pl
from jax.experimental.pallas import tpu as pltpu


# ------------------------------ small helpers ------------------------------ #

def _round_up(n, m):
    return -(-n // m) * m


def _vmem_tile_bytes(rows, cols, itemsize=4):
    """Approximate VMEM footprint of a 2-D f32 tile ((8,128) padded)."""
    return _round_up(max(rows, 1), 8) * _round_up(max(cols, 1), 128) * itemsize


def _vmem_capacity_bytes():
    try:
        cap = int(getattr(pltpu.get_tpu_info(), "vmem_capacity_bytes"))
        if cap > 0:
            return cap
    except Exception:
        pass
    return 64 * 1024 * 1024  # v7x per-TensorCore VMEM; conservative default


def _choose_rows_per_tile(h, w, c_in, c_out, batch, budget_bytes):
    """Pick TH (output rows per spatial tile).

    Constraints / preferences (perf-review items):
      * TH divides H               -> no partial tiles, no OOB halo reads
      * TH*W is a multiple of 128  -> lane-dense unmasked output stores (or TH == H)
      * double-buffered footprint fits the per-generation VMEM budget
      * grid (B, H/TH) has >= 2 cells (v7x megacore), prefer an even split
      * otherwise: the biggest tile (fewer grid steps, less per-step overhead)
    """
    lp = (h + 2) * w + 2
    fixed = (2 * _vmem_tile_bytes(c_in, lp)            # resident padded image (x2 bufs)
             + 2 * _vmem_tile_bytes(c_out, 9 * c_in)   # weights
             + 2 * _vmem_tile_bytes(c_out, 1))         # (optional) bias

    def footprint(th):
        thw = th * w
        return (fixed
                + 2 * _vmem_tile_bytes(c_out, thw)               # double-buffered out tile
                + _vmem_tile_bytes(c_out, thw)                   # f32 accumulator scratch
                + _vmem_tile_bytes(c_in, thw + 2 * w + 2))       # live halo window

    candidates = [th for th in range(1, h + 1)
                  if h % th == 0 and ((th * w) % 128 == 0 or th == h)]
    fitting = [th for th in candidates if footprint(th) <= budget_bytes]
    pool = fitting if fitting else candidates[:1]
    # TODO(synk): for images too large for a resident (C_in, (H+2)*W) block, also tile
    # the input (manual halo DMA); not needed at the sizes this embedding conv sees.

    def score(th):
        thw = th * w
        cells = batch * (h // th)
        return ((thw % 128 == 0),                 # lane-dense output stores
                cells >= 2,                       # >= 2 grid cells for v7x megacore
                (cells % 2 == 0) or cells >= 8,   # balanced split across 2 TCs
                min(thw, 16384),                  # big tiles amortize per-step overhead
                -thw)                             # ...but don't grow past that

    return max(pool, key=score)


# ------------------------------ Pallas kernel ------------------------------ #

def _make_conv3x3_kernel(c_in, c_out, w, th, n_row_tiles, use_bias):
    thw = th * w                 # flat spatial tile (whole output rows)
    win = thw + 2 * w + 2        # tile + (dy, dx) halo in the flat padded image
    taps = [(dy, dx) for dy in range(3) for dx in range(3)]

    def kernel(*refs):
        if use_bias:
            w_ref, b_ref, x_ref, o_ref, acc_ref = refs
        else:
            w_ref, x_ref, o_ref, acc_ref = refs
            b_ref = None

        if n_row_tiles == 1:
            p0 = 0  # fully static slicing (single-tile / small-image path)
        else:
            # tile starts are 128-aligned: thw % 128 == 0 whenever n_row_tiles > 1
            p0 = pl.multiple_of(pl.program_id(1) * thw, 128)

        # One dense load of tile + halo; every tap is a cheap static lane-shift of it.
        window = x_ref[0, :, pl.ds(p0, win)]                 # (C_in, THW + 2W + 2)

        # Horizontal shifts wrap across image rows in the flattened layout; those
        # lanes must be zero (they are the conv's left/right zero padding).
        col = jax.lax.broadcasted_iota(jnp.int32, (1, thw), 1) % w
        not_left = col != 0           # mask for dx == 0 taps
        not_right = col != (w - 1)    # mask for dx == 2 taps
        zero = jnp.zeros((), dtype=window.dtype)

        for t, (dy, dx) in enumerate(taps):
            off = dy * w + dx
            tap = window[:, off:off + thw]                   # (C_in, THW)
            if dx == 0:
                tap = jnp.where(not_left, tap, zero)
            elif dx == 2:
                tap = jnp.where(not_right, tap, zero)
            w_tap = w_ref[:, t * c_in:(t + 1) * c_in]        # (C_out, C_in)
            contrib = jnp.dot(w_tap, tap, preferred_element_type=jnp.float32)
            if t == 0:
                acc_ref[...] = contrib
            else:
                acc_ref[...] += contrib

        acc = acc_ref[...]
        if use_bias:
            acc = acc + b_ref[...]                           # (C_out, 1) broadcast
        o_ref[0] = acc.astype(o_ref.dtype)

    return kernel


# ------------------------------ host wrapper ------------------------------- #

def conv3x3_pallas(x, weight, bias=None):
    """3x3, stride-1, pad-1 convolution.

    x:      (B, C_in, H, W)  NCHW
    weight: (C_out, C_in, 3, 3)  (PyTorch OIHW layout)
    bias:   (C_out,) or None
    returns (B, C_out, H, W) NCHW
    """
    b, c_in, h, w = x.shape
    c_out = weight.shape[0]
    p = h * w
    lp = (h + 2) * w + 2

    vmem_cap = _vmem_capacity_bytes()
    th = _choose_rows_per_tile(h, w, c_in, c_out, b,
                               budget_bytes=max(16 << 20, int(vmem_cap * 0.45)))
    thw = th * w
    n_row_tiles = h // th

    # Cheap host-side prep (no 9x im2col duplication): zero-pad the rows, flatten the
    # spatial dims, and add a 1-element guard at each end so every (dy, dx) tap of a
    # row tile is a contiguous window of the flat buffer.
    x_rows = jnp.pad(x, ((0, 0), (0, 0), (1, 1), (0, 0)))              # (B, C, H+2, W)
    x_flat = jnp.pad(x_rows.reshape(b, c_in, (h + 2) * w),
                     ((0, 0), (0, 0), (1, 1)))                         # (B, C, Lp)

    # weight (O, I, 3, 3) -> (O, 9*I), flattened in (dy, dx, ci) order (ci fastest).
    w_mat = jnp.transpose(weight, (0, 2, 3, 1)).reshape(c_out, 9 * c_in)

    kernel = _make_conv3x3_kernel(c_in, c_out, w, th, n_row_tiles, bias is not None)

    w_spec = pl.BlockSpec((c_out, 9 * c_in), lambda bi, pi: (0, 0))    # resident
    x_spec = pl.BlockSpec((1, c_in, lp), lambda bi, pi: (bi, 0, 0))    # resident / image
    o_spec = pl.BlockSpec((1, c_out, thw), lambda bi, pi: (bi, 0, pi))

    if bias is None:
        in_specs = [w_spec, x_spec]
        args = (w_mat, x_flat)
    else:
        b_spec = pl.BlockSpec((c_out, 1), lambda bi, pi: (0, 0))
        in_specs = [w_spec, b_spec, x_spec]
        args = (w_mat, bias.reshape(c_out, 1), x_flat)

    out_flat = pl.pallas_call(
        kernel,
        out_shape=jax.ShapeDtypeStruct((b, c_out, p), x.dtype),
        grid_spec=pltpu.PrefetchScalarGridSpec(
            num_scalar_prefetch=0,
            grid=(b, n_row_tiles),
            in_specs=in_specs,
            out_specs=o_spec,
            scratch_shapes=[pltpu.VMEM((c_out, thw), jnp.float32)],
        ),
        compiler_params=pltpu.CompilerParams(
            dimension_semantics=("parallel", "parallel"),
            vmem_limit_bytes=int(min(vmem_cap * 0.85, 100 * 1024 * 1024)),
        ),
    )(*args)

    # (B, C_out, H*W) is exactly the NCHW output laid out contiguously: free reshape.
    return out_flat.reshape(b, c_out, h, w)


class Conv3x3Pallas:
    """JAX/Pallas equivalent of models/transformerBlock.conv3x3."""

    def __init__(self, in_c=3, embed_dim=48, bias=False, *, key=None):
        if key is None:
            key = jax.random.PRNGKey(0)
        wkey, bkey = jax.random.split(key)
        fan_in = in_c * 9
        bound = 1.0 / (fan_in ** 0.5)
        self.weight = jax.random.uniform(
            wkey, (embed_dim, in_c, 3, 3), minval=-bound, maxval=bound,
            dtype=jnp.float32)
        self.bias = (
            jax.random.uniform(bkey, (embed_dim,), minval=-bound, maxval=bound,
                               dtype=jnp.float32)
            if bias else None)

    def __call__(self, x):
        return conv3x3_pallas(x, self.weight, self.bias)


# ------------------------------- reference --------------------------------- #

def _reference(x, weight, bias):
    out = jax.lax.conv_general_dilated(
        x, weight, window_strides=(1, 1), padding=((1, 1), (1, 1)),
        dimension_numbers=("NCHW", "OIHW", "NCHW"),
        precision=jax.lax.Precision.HIGHEST)
    if bias is not None:
        out = out + bias[None, :, None, None]
    return out


if __name__ == "__main__":
    key = jax.random.PRNGKey(0)
    xkey, mkey_nobias, mkey_bias = jax.random.split(key, 3)

    B, C_IN, H, W, C_OUT = 2, 3, 16, 16, 48
    x = jax.random.normal(xkey, (B, C_IN, H, W), dtype=jnp.float32)

    ok = True
    for use_bias, mkey in ((False, mkey_nobias), (True, mkey_bias)):
        m = Conv3x3Pallas(in_c=C_IN, embed_dim=C_OUT, bias=use_bias, key=mkey)
        out = jax.block_until_ready(m(x))
        ref = _reference(x, m.weight, m.bias)
        if out.shape != (B, C_OUT, H, W):
            ok = False
        # Tolerance covers MXU f32-via-bf16-pass differences between the Pallas dot and
        # XLA's conv; structural / indexing errors would show up as O(1) differences.
        if not jnp.allclose(out, ref, atol=5e-3, rtol=5e-3):
            ok = False

    print("KERNEL_OK" if ok else "KERNEL_MISMATCH")
</pallas_src>

<mosaic_0001>
module attributes {stable_mosaic.version = 11 : i64} {
  func.func @kernel(%arg0: i32, %arg1: i32, %arg2: memref<48x27xf32, #tpu.memory_space<vmem>>, %arg3: memref<1x3x290xf32, #tpu.memory_space<vmem>>, %arg4: memref<1x48x256xf32, #tpu.memory_space<vmem>>, %arg5: memref<48x256xf32, #tpu.memory_space<vmem>>) attributes {dimension_semantics = [#tpu.dimension_semantics<parallel>, #tpu.dimension_semantics<parallel>], iteration_bounds = array<i64: 2, 1>, scalar_prefetch = 0 : i64, scratch_operands = 1 : i64, tpu.core_type = #tpu.core_type<tc>, window_params = [{pipeline_mode = #tpu.pipeline_mode<synchronous>, transform_indices = @transform_0, window_bounds = array<i64: 48, 27>}, {transform_indices = @transform_1, window_bounds = array<i64: 1, 3, 290>}, {transform_indices = @transform_2, window_bounds = array<i64: 1, 48, 256>}]} {
    %c0 = arith.constant 0 : index
    %c0_0 = arith.constant 0 : index
    %c0_1 = arith.constant 0 : index
    %0 = vector.load %arg3[%c0, %c0_0, %c0_1] : memref<1x3x290xf32, #tpu.memory_space<vmem>>, vector<1x3x290xf32>
    %1 = vector.shape_cast %0 : vector<1x3x290xf32> to vector<3x290xf32>
    %2 = tpu.iota {dimensions = array<i32: 1>} : vector<1x256xi32>
    %c16_i32 = arith.constant 16 : i32
    %c0_i32 = arith.constant 0 : i32
    %3 = arith.cmpi eq, %c16_i32, %c0_i32 : i32
    %c1_i32 = arith.constant 1 : i32
    %4 = arith.select %3, %c1_i32, %c16_i32 : i32
    %5 = vector.broadcast %4 : i32 to vector<1x256xi32>
    %6 = arith.remsi %2, %5 : vector<1x256xi32>
    %c0_i32_2 = arith.constant 0 : i32
    %7 = vector.broadcast %c0_i32_2 : i32 to vector<1x256xi32>
    %8 = arith.cmpi ne, %6, %7 : vector<1x256xi32>
    %c0_i32_3 = arith.constant 0 : i32
    %9 = vector.broadcast %c0_i32_3 : i32 to vector<1x256xi32>
    %10 = arith.cmpi slt, %6, %9 : vector<1x256xi32>
    %c0_i32_4 = arith.constant 0 : i32
    %11 = arith.cmpi slt, %4, %c0_i32_4 : i32
    %12 = vector.broadcast %11 : i1 to vector<1x256xi1>
    %13 = vector.broadcast %12 : vector<1x256xi1> to vector<1x256xi1>
    %14 = arith.xori %10, %13 : vector<1x256xi1>
    %15 = arith.andi %14, %8 : vector<1x256xi1>
    %16 = vector.broadcast %4 : i32 to vector<1x256xi32>
    %17 = arith.addi %6, %16 : vector<1x256xi32>
    %18 = arith.select %15, %17, %6 : vector<1x256xi1>, vector<1x256xi32>
    %c0_i32_5 = arith.constant 0 : i32
    %19 = vector.broadcast %c0_i32_5 : i32 to vector<1x256xi32>
    %20 = arith.cmpi ne, %18, %19 : vector<1x256xi32>
    %c15_i32 = arith.constant 15 : i32
    %21 = vector.broadcast %c15_i32 : i32 to vector<1x256xi32>
    %22 = arith.cmpi ne, %18, %21 : vector<1x256xi32>
    %23 = vector.extract_strided_slice %1 {offsets = [0, 0], sizes = [3, 256], strides = [1, 1]} : vector<3x290xf32> to vector<3x256xf32>
    %cst = arith.constant 0.000000e+00 : f32
    %24 = vector.shape_cast %20 : vector<1x256xi1> to vector<1x256xi1>
    %25 = vector.broadcast %24 : vector<1x256xi1> to vector<3x256xi1>
    %26 = vector.broadcast %cst : f32 to vector<3x256xf32>
    %27 = arith.select %25, %23, %26 : vector<3x256xi1>, vector<3x256xf32>
    %c0_6 = arith.constant 0 : index
    %c0_7 = arith.constant 0 : index
    %28 = vector.load %arg2[%c0_6, %c0_7] : memref<48x27xf32, #tpu.memory_space<vmem>>, vector<48x3xf32>
    %cst_8 = arith.constant dense<0.000000e+00> : vector<48x256xf32>
    %29 = tpu.matmul %28, %27, %cst_8 {dimension_numbers = #tpu.dot_dimension_numbers<[1], [0], [0], [1], [0, 0, 1, 1], [], []>} : vector<48x3xf32>, vector<3x256xf32>, vector<48x256xf32> -> vector<48x256xf32>
    %c0_9 = arith.constant 0 : index
    %c0_10 = arith.constant 0 : index
    %30 = vector.load %arg5[%c0_9, %c0_10] : memref<48x256xf32, #tpu.memory_space<vmem>>, vector<48x256xf32>
    tpu.vector_store %arg5[%c0_9, %c0_10], %29 {strides = array<i32>} : memref<48x256xf32, #tpu.memory_space<vmem>>, vector<48x256xf32>,
    %31 = vector.extract_strided_slice %1 {offsets = [0, 1], sizes = [3, 256], strides = [1, 1]} : vector<3x290xf32> to vector<3x256xf32>
    %c0_11 = arith.constant 0 : index
    %c3 = arith.constant 3 : index
    %32 = vector.load %arg2[%c0_11, %c3] : memref<48x27xf32, #tpu.memory_space<vmem>>, vector<48x3xf32>
    %cst_12 = arith.constant dense<0.000000e+00> : vector<48x256xf32>
    %33 = tpu.matmul %32, %31, %cst_12 {dimension_numbers = #tpu.dot_dimension_numbers<[1], [0], [0], [1], [0, 0, 1, 1], [], []>} : vector<48x3xf32>, vector<3x256xf32>, vector<48x256xf32> -> vector<48x256xf32>
    %c0_13 = arith.constant 0 : index
    %c0_14 = arith.constant 0 : index
    %34 = vector.load %arg5[%c0_13, %c0_14] : memref<48x256xf32, #tpu.memory_space<vmem>>, vector<48x256xf32>
    %35 = arith.addf %34, %33 : vector<48x256xf32>
    %c0_15 = arith.constant 0 : index
    %c0_16 = arith.constant 0 : index
    %36 = vector.load %arg5[%c0_15, %c0_16] : memref<48x256xf32, #tpu.memory_space<vmem>>, vector<48x256xf32>
    tpu.vector_store %arg5[%c0_15, %c0_16], %35 {strides = array<i32>} : memref<48x256xf32, #tpu.memory_space<vmem>>, vector<48x256xf32>,
    %37 = vector.extract_strided_slice %1 {offsets = [0, 2], sizes = [3, 256], strides = [1, 1]} : vector<3x290xf32> to vector<3x256xf32>
    %cst_17 = arith.constant 0.000000e+00 : f32
    %38 = vector.shape_cast %22 : vector<1x256xi1> to vector<1x256xi1>
    %39 = vector.broadcast %38 : vector<1x256xi1> to vector<3x256xi1>
    %40 = vector.broadcast %cst_17 : f32 to vector<3x256xf32>
    %41 = arith.select %39, %37, %40 : vector<3x256xi1>, vector<3x256xf32>
    %c0_18 = arith.constant 0 : index
    %c6 = arith.constant 6 : index
    %42 = vector.load %arg2[%c0_18, %c6] : memref<48x27xf32, #tpu.memory_space<vmem>>, vector<48x3xf32>
    %cst_19 = arith.constant dense<0.000000e+00> : vector<48x256xf32>
    %43 = tpu.matmul %42, %41, %cst_19 {dimension_numbers = #tpu.dot_dimension_numbers<[1], [0], [0], [1], [0, 0, 1, 1], [], []>} : vector<48x3xf32>, vector<3x256xf32>, vector<48x256xf32> -> vector<48x256xf32>
    %c0_20 = arith.constant 0 : index
    %c0_21 = arith.constant 0 : index
    %44 = vector.load %arg5[%c0_20, %c0_21] : memref<48x256xf32, #tpu.memory_space<vmem>>, vector<48x256xf32>
    %45 = arith.addf %44, %43 : vector<48x256xf32>
    %c0_22 = arith.constant 0 : index
    %c0_23 = arith.constant 0 : index
    %46 = vector.load %arg5[%c0_22, %c0_23] : memref<48x256xf32, #tpu.memory_space<vmem>>, vector<48x256xf32>
    tpu.vector_store %arg5[%c0_22, %c0_23], %45 {strides = array<i32>} : memref<48x256xf32, #tpu.memory_space<vmem>>, vector<48x256xf32>,
    %47 = vector.extract_strided_slice %1 {offsets = [0, 16], sizes = [3, 256], strides = [1, 1]} : vector<3x290xf32> to vector<3x256xf32>
    %cst_24 = arith.constant 0.000000e+00 : f32
    %48 = vector.shape_cast %20 : vector<1x256xi1> to vector<1x256xi1>
    %49 = vector.broadcast %48 : vector<1x256xi1> to vector<3x256xi1>
    %50 = vector.broadcast %cst_24 : f32 to vector<3x256xf32>
    %51 = arith.select %49, %47, %50 : vector<3x256xi1>, vector<3x256xf32>
    %c0_25 = arith.constant 0 : index
    %c9 = arith.constant 9 : index
    %52 = vector.load %arg2[%c0_25, %c9] : memref<48x27xf32, #tpu.memory_space<vmem>>, vector<48x3xf32>
    %cst_26 = arith.constant dense<0.000000e+00> : vector<48x256xf32>
    %53 = tpu.matmul %52, %51, %cst_26 {dimension_numbers = #tpu.dot_dimension_numbers<[1], [0], [0], [1], [0, 0, 1, 1], [], []>} : vector<48x3xf32>, vector<3x256xf32>, vector<48x256xf32> -> vector<48x256xf32>
    %c0_27 = arith.constant 0 : index
    %c0_28 = arith.constant 0 : index
    %54 = vector.load %arg5[%c0_27, %c0_28] : memref<48x256xf32, #tpu.memory_space<vmem>>, vector<48x256xf32>
    %55 = arith.addf %54, %53 : vector<48x256xf32>
    %c0_29 = arith.constant 0 : index
    %c0_30 = arith.constant 0 : index
    %56 = vector.load %arg5[%c0_29, %c0_30] : memref<48x256xf32, #tpu.memory_space<vmem>>, vector<48x256xf32>
    tpu.vector_store %arg5[%c0_29, %c0_30], %55 {strides = array<i32>} : memref<48x256xf32, #tpu.memory_space<vmem>>, vector<48x256xf32>,
    %57 = vector.extract_strided_slice %1 {offsets = [0, 17], sizes = [3, 256], strides = [1, 1]} : vector<3x290xf32> to vector<3x256xf32>
    %c0_31 = arith.constant 0 : index
    %c12 = arith.constant 12 : index
    %58 = vector.load %arg2[%c0_31, %c12] : memref<48x27xf32, #tpu.memory_space<vmem>>, vector<48x3xf32>
    %cst_32 = arith.constant dense<0.000000e+00> : vector<48x256xf32>
    %59 = tpu.matmul %58, %57, %cst_32 {dimension_numbers = #tpu.dot_dimension_numbers<[1], [0], [0], [1], [0, 0, 1, 1], [], []>} : vector<48x3xf32>, vector<3x256xf32>, vector<48x256xf32> -> vector<48x256xf32>
    %c0_33 = arith.constant 0 : index
    %c0_34 = arith.constant 0 : index
    %60 = vector.load %arg5[%c0_33, %c0_34] : memref<48x256xf32, #tpu.memory_space<vmem>>, vector<48x256xf32>
    %61 = arith.addf %60, %59 : vector<48x256xf32>
    %c0_35 = arith.constant 0 : index
    %c0_36 = arith.constant 0 : index
    %62 = vector.load %arg5[%c0_35, %c0_36] : memref<48x256xf32, #tpu.memory_space<vmem>>, vector<48x256xf32>
    tpu.vector_store %arg5[%c0_35, %c0_36], %61 {strides = array<i32>} : memref<48x256xf32, #tpu.memory_space<vmem>>, vector<48x256xf32>,
    %63 = vector.extract_strided_slice %1 {offsets = [0, 18], sizes = [3, 256], strides = [1, 1]} : vector<3x290xf32> to vector<3x256xf32>
    %cst_37 = arith.constant 0.000000e+00 : f32
    %64 = vector.shape_cast %22 : vector<1x256xi1> to vector<1x256xi1>
    %65 = vector.broadcast %64 : vector<1x256xi1> to vector<3x256xi1>
    %66 = vector.broadcast %cst_37 : f32 to vector<3x256xf32>
    %67 = arith.select %65, %63, %66 : vector<3x256xi1>, vector<3x256xf32>
    %c0_38 = arith.constant 0 : index
    %c15 = arith.constant 15 : index
    %68 = vector.load %arg2[%c0_38, %c15] : memref<48x27xf32, #tpu.memory_space<vmem>>, vector<48x3xf32>
    %cst_39 = arith.constant dense<0.000000e+00> : vector<48x256xf32>
    %69 = tpu.matmul %68, %67, %cst_39 {dimension_numbers = #tpu.dot_dimension_numbers<[1], [0], [0], [1], [0, 0, 1, 1], [], []>} : vector<48x3xf32>, vector<3x256xf32>, vector<48x256xf32> -> vector<48x256xf32>
    %c0_40 = arith.constant 0 : index
    %c0_41 = arith.constant 0 : index
    %70 = vector.load %arg5[%c0_40, %c0_41] : memref<48x256xf32, #tpu.memory_space<vmem>>, vector<48x256xf32>
    %71 = arith.addf %70, %69 : vector<48x256xf32>
    %c0_42 = arith.constant 0 : index
    %c0_43 = arith.constant 0 : index
    %72 = vector.load %arg5[%c0_42, %c0_43] : memref<48x256xf32, #tpu.memory_space<vmem>>, vector<48x256xf32>
    tpu.vector_store %arg5[%c0_42, %c0_43], %71 {strides = array<i32>} : memref<48x256xf32, #tpu.memory_space<vmem>>, vector<48x256xf32>,
    %73 = vector.extract_strided_slice %1 {offsets = [0, 32], sizes = [3, 256], strides = [1, 1]} : vector<3x290xf32> to vector<3x256xf32>
    %cst_44 = arith.constant 0.000000e+00 : f32
    %74 = vector.shape_cast %20 : vector<1x256xi1> to vector<1x256xi1>
    %75 = vector.broadcast %74 : vector<1x256xi1> to vector<3x256xi1>
    %76 = vector.broadcast %cst_44 : f32 to vector<3x256xf32>
    %77 = arith.select %75, %73, %76 : vector<3x256xi1>, vector<3x256xf32>
    %c0_45 = arith.constant 0 : index
    %c18 = arith.constant 18 : index
    %78 = vector.load %arg2[%c0_45, %c18] : memref<48x27xf32, #tpu.memory_space<vmem>>, vector<48x3xf32>
    %cst_46 = arith.constant dense<0.000000e+00> : vector<48x256xf32>
    %79 = tpu.matmul %78, %77, %cst_46 {dimension_numbers = #tpu.dot_dimension_numbers<[1], [0], [0], [1], [0, 0, 1, 1], [], []>} : vector<48x3xf32>, vector<3x256xf32>, vector<48x256xf32> -> vector<48x256xf32>
    %c0_47 = arith.constant 0 : index
    %c0_48 = arith.constant 0 : index
    %80 = vector.load %arg5[%c0_47, %c0_48] : memref<48x256xf32, #tpu.memory_space<vmem>>, vector<48x256xf32>
    %81 = arith.addf %80, %79 : vector<48x256xf32>
    %c0_49 = arith.constant 0 : index
    %c0_50 = arith.constant 0 : index
    %82 = vector.load %arg5[%c0_49, %c0_50] : memref<48x256xf32, #tpu.memory_space<vmem>>, vector<48x256xf32>
    tpu.vector_store %arg5[%c0_49, %c0_50], %81 {strides = array<i32>} : memref<48x256xf32, #tpu.memory_space<vmem>>, vector<48x256xf32>,
    %83 = vector.extract_strided_slice %1 {offsets = [0, 33], sizes = [3, 256], strides = [1, 1]} : vector<3x290xf32> to vector<3x256xf32>
    %c0_51 = arith.constant 0 : index
    %c21 = arith.constant 21 : index
    %84 = vector.load %arg2[%c0_51, %c21] : memref<48x27xf32, #tpu.memory_space<vmem>>, vector<48x3xf32>
    %cst_52 = arith.constant dense<0.000000e+00> : vector<48x256xf32>
    %85 = tpu.matmul %84, %83, %cst_52 {dimension_numbers = #tpu.dot_dimension_numbers<[1], [0], [0], [1], [0, 0, 1, 1], [], []>} : vector<48x3xf32>, vector<3x256xf32>, vector<48x256xf32> -> vector<48x256xf32>
    %c0_53 = arith.constant 0 : index
    %c0_54 = arith.constant 0 : index
    %86 = vector.load %arg5[%c0_53, %c0_54] : memref<48x256xf32, #tpu.memory_space<vmem>>, vector<48x256xf32>
    %87 = arith.addf %86, %85 : vector<48x256xf32>
    %c0_55 = arith.constant 0 : index
    %c0_56 = arith.constant 0 : index
    %88 = vector.load %arg5[%c0_55, %c0_56] : memref<48x256xf32, #tpu.memory_space<vmem>>, vector<48x256xf32>
    tpu.vector_store %arg5[%c0_55, %c0_56], %87 {strides = array<i32>} : memref<48x256xf32, #tpu.memory_space<vmem>>, vector<48x256xf32>,
    %89 = vector.extract_strided_slice %1 {offsets = [0, 34], sizes = [3, 256], strides = [1, 1]} : vector<3x290xf32> to vector<3x256xf32>
    %cst_57 = arith.constant 0.000000e+00 : f32
    %90 = vector.shape_cast %22 : vector<1x256xi1> to vector<1x256xi1>
    %91 = vector.broadcast %90 : vector<1x256xi1> to vector<3x256xi1>
    %92 = vector.broadcast %cst_57 : f32 to vector<3x256xf32>
    %93 = arith.select %91, %89, %92 : vector<3x256xi1>, vector<3x256xf32>
    %c0_58 = arith.constant 0 : index
    %c24 = arith.constant 24 : index
    %94 = vector.load %arg2[%c0_58, %c24] : memref<48x27xf32, #tpu.memory_space<vmem>>, vector<48x3xf32>
    %cst_59 = arith.constant dense<0.000000e+00> : vector<48x256xf32>
    %95 = tpu.matmul %94, %93, %cst_59 {dimension_numbers = #tpu.dot_dimension_numbers<[1], [0], [0], [1], [0, 0, 1, 1], [], []>} : vector<48x3xf32>, vector<3x256xf32>, vector<48x256xf32> -> vector<48x256xf32>
    %c0_60 = arith.constant 0 : index
    %c0_61 = arith.constant 0 : index
    %96 = vector.load %arg5[%c0_60, %c0_61] : memref<48x256xf32, #tpu.memory_space<vmem>>, vector<48x256xf32>
    %97 = arith.addf %96, %95 : vector<48x256xf32>
    %c0_62 = arith.constant 0 : index
    %c0_63 = arith.constant 0 : index
    %98 = vector.load %arg5[%c0_62, %c0_63] : memref<48x256xf32, #tpu.memory_space<vmem>>, vector<48x256xf32>
    tpu.vector_store %arg5[%c0_62, %c0_63], %97 {strides = array<i32>} : memref<48x256xf32, #tpu.memory_space<vmem>>, vector<48x256xf32>,
    %c0_64 = arith.constant 0 : index
    %c0_65 = arith.constant 0 : index
    %99 = vector.load %arg5[%c0_64, %c0_65] : memref<48x256xf32, #tpu.memory_space<vmem>>, vector<48x256xf32>
    %c0_66 = arith.constant 0 : index
    %c0_67 = arith.constant 0 : index
    %c0_68 = arith.constant 0 : index
    %100 = vector.load %arg4[%c0_66, %c0_67, %c0_68] : memref<1x48x256xf32, #tpu.memory_space<vmem>>, vector<1x48x256xf32>
    %101 = vector.shape_cast %100 : vector<1x48x256xf32> to vector<48x256xf32>
    %102 = vector.shape_cast %99 : vector<48x256xf32> to vector<1x48x256xf32>
    tpu.vector_store %arg4[%c0_66, %c0_67, %c0_68], %102 {strides = array<i32>} : memref<1x48x256xf32, #tpu.memory_space<vmem>>, vector<1x48x256xf32>,
    return
  }
  func.func @transform_0(%arg0: i32, %arg1: i32) -> (i32, i32) {
    %c0_i32 = arith.constant 0 : i32
    %c0_i32_0 = arith.constant 0 : i32
    %c0_i32_1 = arith.constant 0 : i32
    return %c0_i32, %c0_i32_0 : i32, i32
  }
  func.func @transform_1(%arg0: i32, %arg1: i32) -> (i32, i32, i32) {
    %c0_i32 = arith.constant 0 : i32
    %c0_i32_0 = arith.constant 0 : i32
    %c0_i32_1 = arith.constant 0 : i32
    return %arg0, %c0_i32, %c0_i32_0 : i32, i32, i32
  }
  func.func @transform_2(%arg0: i32, %arg1: i32) -> (i32, i32, i32) {
    %c0_i32 = arith.constant 0 : i32
    %c0_i32_0 = arith.constant 0 : i32
    return %arg0, %c0_i32, %arg1 : i32, i32, i32
  }
}

</mosaic_0001>

<llo_original>
// kernel: tpu_custom_call.1
$region0: #{tpu_custom_call.1}
  #allocation0 [shape = 'u32[]', space=smem, size = 0x4, offset = 0x4, fixed_abs, tag = 'smem constant byte address 0x4 - core index']
  #allocation1 [shape = 'u32[144,128]{1,0:T(1,128)}', space=vmem, size = 0x12000, scoped, tag = 'internal scratch']
  #allocation2 [shape = 'f32[48,256]{1,0:T(8,128)}', space=vmem, size = 0xc000, scoped, tag = 'scratch operand']
  %s0 = inlined_call_operand.vmem [shape: f32[48,27], index: 0, kind: input, shape index: {}]
  %s1 = inlined_call_operand.vmem [shape: f32[2,3,290], index: 1, kind: input, shape index: {}]
  %s2 = inlined_call_operand.hbm [shape: f32[2,48,256], index: 2, kind: output, shape index: {}]
  %s3 = sld [smem:[#allocation0]]
  $region41: #{tpu_custom_call.1} parent=0
    _
  %s5 = ssub.s32 1, %s3
  %s6 = scalar_select 0, %s5, %s3
  $region1: #{tpu_custom_call.1} parent=0
    #allocation3 [shape = 'u8[98304]{0}', space=vmem, size = 0x18000, scoped, tag = 'output window, operand 0']
    #allocation4 [shape = 's32[2]{0}', space=sflag, size = 0x8, scoped, tag = 'scoped memory for tpu_custom_call.1']
    %7 = vsyncpa [#allocation4], 0
    %s8 = scalar_lea.sflag [#allocation4], 1
    %9 = vsyncpa %s8, 0
    loop: start=0, step=1, limit=4
    $region2: #{tpu_custom_call.1} parent=1 // loop_pre_header
      _
    $region3: #{tpu_custom_call.1} parent=1 // loop_header
      %s11 = sphi 0, %s15
      %p12 = scmp.ge.s32.totalorder %s11, 4
      %s18 = sphi 0, %s30
      %s19 = sphi 0, %s26
      %s20 = sphi 0, %s18
      %s21 = sphi 0, %s19
      %s22 = sphi 0, %s20
      %s23 = sphi 0, %s21
      %s31 = sphi 0, %s31
      %s33 = sphi 0, %s31
      %s34 = sphi 0, %s33
      %s48 = sphi 0, %s34
      %s54 = sphi 0, %s56
      %s57 = sphi 0, %s54
      %s58 = sphi 0, %s57
      %s74 = sphi 0, %s58
      %s82 = sphi 0, %s84
      %s85 = sphi 0, %s82
      %s86 = sphi 0, %s85
      %s102 = sphi 0, %s86
    $region4: #{tpu_custom_call.1} parent=1 // loop_header_branch
      %14 = sbr.rel (%p12) target = $region8
    $region5: #{tpu_custom_call.1} parent=1 // loop_body
      %s16 = ssub.s32 %s11, 1
      %s17 = ssub.s32 %s11, 2
      %s24 = sadd.s32 1, %s19
      %p25 = scmp.ge.s32.totalorder %s24, 1
      %s26 = scalar_select %p25, 0, %s24
      %s27 = sadd.s32 1, %s18
      %s28 = scalar_select %p25, %s27, %s18
      %p29 = scmp.ge.s32.totalorder %s28, 2
      %s30 = scalar_select %p29, 0, %s28
      %s32 = sadd.s32 %s31, 1
      %p35 = scmp.eq.s32.totalorder %s11, 1
      %p36 = scmp.ne.s32.totalorder %s31, %s33
      %p37 = scmp.eq.s32.totalorder %s11, 0
      %p38 = por %p36, %p37
      %p39 = scmp.ne.s32.totalorder %s31, %s33
      %p40 = scmp.eq.s32.totalorder %s16, 1
      %p41 = por %p39, %p40
      %p42 = scmp.ne.s32.totalorder %s33, %s34
      %p43 = scmp.eq.s32.totalorder %s16, 0
      %p44 = por %p42, %p43
      %p45 = scmp.ne.s32.totalorder %s33, %s34
      %p46 = scmp.eq.s32.totalorder %s17, 1
      %p47 = por %p45, %p46
      %p49 = scmp.ne.s32.totalorder %s34, %s48
      %p50 = scmp.eq.s32.totalorder %s17, 0
      %p51 = por %p49, %p50
      %s52 = ssub.s32 %s18, %s30
      %p53 = scmp.eq.s32.totalorder %s52, 0
      %s55 = sadd.s32 %s54, 1
      %s56 = scalar_select %p53, %s54, %s55
      %p59 = pneg %p53
      %p60 = scmp.eq.s32.totalorder %s11, 1
      %p61 = por %p59, %p60
      %p62 = scmp.ne.s32.totalorder %s54, %s57
      %p63 = scmp.eq.s32.totalorder %s11, 0
      %p64 = por %p62, %p63
      %p65 = scmp.ne.s32.totalorder %s54, %s57
      %p66 = scmp.eq.s32.totalorder %s16, 1
      %p67 = por %p65, %p66
      %p68 = scmp.ne.s32.totalorder %s57, %s58
      %p69 = scmp.eq.s32.totalorder %s16, 0
      %p70 = por %p68, %p69
      %p71 = scmp.ne.s32.totalorder %s57, %s58
      %p72 = scmp.eq.s32.totalorder %s17, 1
      %p73 = por %p71, %p72
      %p75 = scmp.ne.s32.totalorder %s58, %s74
      %p76 = scmp.eq.s32.totalorder %s17, 0
      %p77 = por %p75, %p76
      %s78 = ssub.s32 %s18, %s30
      %s79 = ssub.s32 %s19, %s26
      %s80 = sor.u32 %s78, %s79
      %p81 = scmp.eq.s32.totalorder %s80, 0
      %s83 = sadd.s32 %s82, 1
      %s84 = scalar_select %p81, %s82, %s83
      %p87 = pneg %p81
      %p88 = scmp.eq.s32.totalorder %s11, 1
      %p89 = por %p87, %p88
      %p90 = scmp.ne.s32.totalorder %s82, %s85
      %p91 = scmp.eq.s32.totalorder %s11, 0
      %p92 = por %p90, %p91
      %p93 = scmp.ne.s32.totalorder %s82, %s85
      %p94 = scmp.eq.s32.totalorder %s16, 1
      %p95 = por %p93, %p94
      %p96 = scmp.ne.s32.totalorder %s85, %s86
      %p97 = scmp.eq.s32.totalorder %s16, 0
      %p98 = por %p96, %p97
      %p99 = scmp.ne.s32.totalorder %s85, %s86
      %p100 = scmp.eq.s32.totalorder %s17, 1
      %p101 = por %p99, %p100
      %p103 = scmp.ne.s32.totalorder %s86, %s102
      %p104 = scmp.eq.s32.totalorder %s17, 0
      %p105 = por %p103, %p104
      %p106 = scmp.le.s32.totalorder 1, %s11
      %p107 = scmp.lt.s32.totalorder %s11, 3
      %p108 = pnand %p106, %p107
      %p109 = pneg %p108
      // Predicated region
      $region9: #{tpu_custom_call.1} parent=5 // pred_check
        _
      $region10: #{tpu_custom_call.1} parent=5 // pred_check_branch
        %111 = sbr.rel (%p108) target = $region12
      $region11: #{tpu_custom_call.1} parent=5 // pred_region
        %s112 = ssub.s32 %s11, 1
        // Predicated region
        $region13: #{tpu_custom_call.1} parent=11 // pred_check
          %p113 = pneg %p44
        $region14: #{tpu_custom_call.1} parent=11 // pred_check_branch
          %115 = sbr.rel (%p113) target = $region16
        $region15: #{tpu_custom_call.1} parent=11 // pred_region
          _
        $region16: #{tpu_custom_call.1} parent=11 // pred_fallthru
          _
      $region12: #{tpu_custom_call.1} parent=5 // pred_fallthru
        _
      %p116 = scmp.lt.s32.totalorder %s11, 2
      // Predicated region
      $region17: #{tpu_custom_call.1} parent=5 // pred_check
        %p117 = pneg %p116
      $region18: #{tpu_custom_call.1} parent=5 // pred_check_branch
        %119 = sbr.rel (%p117) target = $region20
      $region19: #{tpu_custom_call.1} parent=5 // pred_region
        // Predicated region
        $region21: #{tpu_custom_call.1} parent=19 // pred_check
          %p120 = pneg %p64
        $region22: #{tpu_custom_call.1} parent=19 // pred_check_branch
          %122 = sbr.rel (%p120) target = $region24
        $region23: #{tpu_custom_call.1} parent=19 // pred_region
          %p123 = scmp.lt.s32.totalorder %s18, 1
          %s124 = scalar_select %p123, %s18, 1
          %s125 = smul.addr %s124, 3
          %s126 = smul.addr %s125, 4
          %s127 = scalar_lea.vmem %s1, %s126
        $region24: #{tpu_custom_call.1} parent=19 // pred_fallthru
          _
      $region20: #{tpu_custom_call.1} parent=5 // pred_fallthru
        _
      %p128 = scmp.le.s32.totalorder 1, %s11
      %p129 = scmp.lt.s32.totalorder %s11, 3
      %p130 = pnand %p128, %p129
      %p131 = pneg %p130
      // Predicated region
      $region25: #{tpu_custom_call.1} parent=5 // pred_check
        _
      $region26: #{tpu_custom_call.1} parent=5 // pred_check_branch
        %133 = sbr.rel (%p130) target = $region28
      $region27: #{tpu_custom_call.1} parent=5 // pred_region
        %s134 = ssub.s32 %s11, 1
        %p135 = pneg %p44
        %p136 = pneg %p41
        %p137 = scmp.lt.s32.totalorder %s20, 1
        %s138 = scalar_select %p137, %s20, 1
        %s139 = smul.addr %s138, 3
        %s140 = smul.addr %s139, 4
        %s141 = scalar_lea.vmem %s1, %s140
        %p142 = pneg %p70
        %p143 = pneg %p67
        %p144 = pneg %p98
        %p145 = pneg %p95
        %s146 = sand.u32 %s85, 1
        %s147 = scalar_lea.sflag [#allocation4], %s146
        %s148 = sand.u32 %s85, 1
        %s149 = smul.addr %s148, 96
        %s150 = scalar_lea.vmem [#allocation3], %s149
        %p151 = scmp.lt.s32.totalorder %s20, 1
        %s152 = scalar_select %p151, %s20, 1
        %s153 = smul.addr %s152, 3
        %s154 = smul.addr %s153, 4
        %s155 = scalar_lea.vmem %s1, %s154
        %s156 = smul.u32 2, %s21
        %v157 = vld [vmem:[%s155] sm:$0x77]
        %v158 = vld [vmem:[%s155 + $0x8] sm:$0x7]
        %v159 = vlaneseq
        %v160 = vand.u32 %v159, 127
        %v161 = vadd.s32 %v160, 128
        %vm162 = vcmp.lt.s32.totalorder %v160, 0
        %v163 = vsub.s32 0, %v160
        %v164 = vsel %vm162, %v163, %v160
        %v165 = vshrl.u32 %v164, 4
        %v166 = vand.u32 %v164, 15
        %v167 = vsub.s32 0, %v166
        %v168 = vsel %vm162, %v167, %v166
        %vm169 = vcmp.lt.s32.totalorder %v161, 0
        %v170 = vsub.s32 0, %v161
        %v171 = vsel %vm169, %v170, %v161
        %v172 = vshrl.u32 %v171, 4
        %v173 = vand.u32 %v171, 15
        %v174 = vsub.s32 0, %v173
        %v175 = vsel %vm169, %v174, %v173
        %vm176 = vcmp.ne.s32.totalorder %v168, 0
        %vm177 = vcmp.ne.s32.totalorder %v175, 0
        %vm178 = vcmp.lt.s32.totalorder %v168, 0
        %vm179 = vcmp.lt.s32.totalorder %v175, 0
        %vm180 = vmand %vm178, %vm176
        %vm181 = vmand %vm179, %vm177
        %v182 = vadd.s32 %v168, 16
        %v183 = vadd.s32 %v175, 16
        %v184 = vsel %vm180, %v182, %v168
        %v185 = vsel %vm181, %v183, %v175
        %vm186 = vcmp.ne.s32.totalorder %v184, 0
        %vm187 = vcmp.ne.s32.totalorder %v185, 0
        %vm188 = vcmp.ne.s32.totalorder %v184, 15
        %vm189 = vcmp.ne.s32.totalorder %v185, 15
        %v190 = vsel %vm186, 1, 0
        %v191 = vsel %vm187, 1, 0
        %vm192 = vcmp.eq.s32.totalorder %v190, 1
        %vm193 = vcmp.eq.s32.totalorder %v191, 1
        %v195 = vcombine.high %v157, %v157
        %v197 = vsel %vm192, %v157, 0.0
        %v198 = vsel %vm193, %v195, 0.0
        %v199 = vld [vmem:[%s0] sm:$0xff]
        %v200 = vld [vmem:[%s0 + $0x8] sm:$0xff]
        %v201 = vld [vmem:[%s0 + $0x10] sm:$0xff]
        %v202 = vld [vmem:[%s0 + $0x18] sm:$0xff]
        %v203 = vld [vmem:[%s0 + $0x20] sm:$0xff]
        %v204 = vld [vmem:[%s0 + $0x28] sm:$0xff]
        %vm205 = vcmask 23552
        %v207 = vsel %vm205, %v199, 0
        %v210 = vsel %vm205, %v200, 0
        %v213 = vsel %vm205, %v201, 0
        %v216 = vsel %vm205, %v202, 0
        %v219 = vsel %vm205, %v203, 0
        %v222 = vsel %vm205, %v204, 0
        %vm224 = vcmask 1042432
        %v226 = vsel %vm224, %v197, 0
        %v229 = vsel %vm224, %v198, 0
        %231 = vmatprep.subr.mxu0 %v229
        %232 = vmatpush1.msra.mxu0 %v226
        %233 = vmatprep.subr.mxu0 0.0
        %234 = vmatpush1.msra.mxu0 0.0
        %235 = vmatprep.subr.mxu0 0.0
        %236 = vmatpush1.msra.mxu0 0.0
        %237 = vmatprep.subr.mxu0 0.0
        %238 = vmatpush1.msra.mxu0 0.0
        %239 = vmatprep.subr.mxu0 0.0
        %240 = vmatpush1.msra.mxu0 0.0
        %241 = vmatprep.subr.mxu0 0.0
        %242 = vmatpush1.msra.mxu0 0.0
        %243 = vmatprep.subr.mxu0 0.0
        %244 = vmatpush1.msra.mxu0 0.0
        %245 = vmatprep.subr.mxu0 0.0
        %246 = vmatpush1.msra.mxu0 0.0
        %247 = vmatprep.subr.mxu0 0.0
        %248 = vmatpush1.msra.mxu0 0.0
        %249 = vmatprep.subr.mxu0 0.0
        %250 = vmatpush1.msra.mxu0 0.0
        %251 = vmatprep.subr.mxu0 0.0
        %252 = vmatpush1.msra.mxu0 0.0
        %253 = vmatprep.subr.mxu0 0.0
        %254 = vmatpush1.msra.mxu0 0.0
        %255 = vmatprep.subr.mxu0 0.0
        %256 = vmatpush1.msra.mxu0 0.0
        %257 = vmatprep.subr.mxu0 0.0
        %258 = vmatpush1.msra.mxu0 0.0
        %259 = vmatprep.subr.mxu0 0.0
        %260 = vmatpush1.msra.mxu0 0.0
        %261 = vmatprep.subr.mxu0 0.0
        %262 = vmatpush1.msra.mxu0 0.0
        %263 = vmatprep.subr.mxu0 0.0
        %264 = vmatpush1.msra.mxu0 0.0
        %265 = vmatprep.subr.mxu0 0.0
        %266 = vmatpush1.msra.mxu0 0.0
        %267 = vmatprep.subr.mxu0 0.0
        %268 = vmatpush1.msra.mxu0 0.0
        %269 = vmatprep.subr.mxu0 0.0
        %270 = vmatpush1.msra.mxu0 0.0
        %271 = vmatprep.subr.mxu0 0.0
        %272 = vmatpush1.msra.mxu0 0.0
        %273 = vmatprep.subr.mxu0 0.0
        %274 = vmatpush1.msra.mxu0 0.0
        %275 = vmatprep.subr.mxu0 0.0
        %276 = vmatpush1.msra.mxu0 0.0
        %277 = vmatprep.subr.mxu0 0.0
        %278 = vmatpush1.msra.mxu0 0.0
        %279 = vmatprep.subr.mxu0 0.0
        %280 = vmatpush1.msra.mxu0 0.0
        %281 = vmatprep.subr.mxu0 0.0
        %282 = vmatpush1.msra.mxu0 0.0
        %283 = vmatprep.subr.mxu0 0.0
        %284 = vmatpush1.msra.mxu0 0.0
        %285 = vmatprep.subr.mxu0 0.0
        %286 = vmatpush1.msra.mxu0 0.0
        %287 = vmatprep.subr.mxu0 0.0
        %288 = vmatpush1.msra.mxu0 0.0
        %289 = vmatprep.subr.mxu0 0.0
        %290 = vmatpush1.msra.mxu0 0.0
        %291 = vmatprep.subr.mxu0 0.0
        %292 = vmatpush1.msra.mxu0 0.0
        %293 = vmatprep.subr.mxu0 0.0
        %294 = vmatpush1.msra.mxu0 0.0
        %295 = vmatprep.mubr.f32.mxu0 0.0
        %296 = vmatmul.mubr.f32.gmra.mrb[0].mxu0 %v207
        %v297 = vpop.f32.mrb[0].mxu0
        %v298 = vadd.f32 0.0, %v297
        %v299 = vpop.f32.mrb[0].mxu0
        %v300 = vadd.f32 0.0, %v299
        %301 = vmatprep.mubr.f32.mxu0 0.0
        %302 = vmatmul.mubr.f32.gmra.mrb[0].mxu0 %v210
        %v303 = vpop.f32.mrb[0].mxu0
        %v304 = vadd.f32 0.0, %v303
        %v305 = vpop.f32.mrb[0].mxu0
        %v306 = vadd.f32 0.0, %v305
        %307 = vmatprep.mubr.f32.mxu0 0.0
        %308 = vmatmul.mubr.f32.gmra.mrb[0].mxu0 %v213
        %v309 = vpop.f32.mrb[0].mxu0
        %v310 = vadd.f32 0.0, %v309
        %v311 = vpop.f32.mrb[0].mxu0
        %v312 = vadd.f32 0.0, %v311
        %313 = vmatprep.mubr.f32.mxu0 0.0
        %314 = vmatmul.mubr.f32.gmra.mrb[0].mxu0 %v216
        %v315 = vpop.f32.mrb[0].mxu0
        %v316 = vadd.f32 0.0, %v315
        %v317 = vpop.f32.mrb[0].mxu0
        %v318 = vadd.f32 0.0, %v317
        %319 = vmatprep.mubr.f32.mxu0 0.0
        %320 = vmatmul.mubr.f32.gmra.mrb[0].mxu0 %v219
        %v321 = vpop.f32.mrb[0].mxu0
        %v322 = vadd.f32 0.0, %v321
        %v323 = vpop.f32.mrb[0].mxu0
        %v324 = vadd.f32 0.0, %v323
        %325 = vmatprep.mubr.f32.mxu0 0.0
        %326 = vmatmul.mubr.f32.gmra.mrb[0].mxu0 %v222
        %v327 = vpop.f32.mrb[0].mxu0
        %v328 = vadd.f32 0.0, %v327
        %v329 = vpop.f32.mrb[0].mxu0
        %v330 = vadd.f32 0.0, %v329
        %331 = vdwg.mxu0
        %332 = vst [vmem:[#allocation2] sm:$0xff] %v298
        %333 = vst [vmem:[#allocation2 + $0x8] sm:$0xff] %v300
        %334 = vst [vmem:[#allocation2 + $0x10] sm:$0xff] %v304
        %335 = vst [vmem:[#allocation2 + $0x18] sm:$0xff] %v306
        %336 = vst [vmem:[#allocation2 + $0x20] sm:$0xff] %v310
        %337 = vst [vmem:[#allocation2 + $0x28] sm:$0xff] %v312
        %338 = vst [vmem:[#allocation2 + $0x30] sm:$0xff] %v316
        %339 = vst [vmem:[#allocation2 + $0x38] sm:$0xff] %v318
        %340 = vst [vmem:[#allocation2 + $0x40] sm:$0xff] %v322
        %341 = vst [vmem:[#allocation2 + $0x48] sm:$0xff] %v324
        %342 = vst [vmem:[#allocation2 + $0x50] sm:$0xff] %v328
        %343 = vst [vmem:[#allocation2 + $0x58] sm:$0xff] %v330
        %v344 = vld [vmem:[%s0] sm:$0xff]
        %v345 = vld [vmem:[%s0 + $0x8] sm:$0xff]
        %v346 = vld [vmem:[%s0 + $0x10] sm:$0xff]
        %v347 = vld [vmem:[%s0 + $0x18] sm:$0xff]
        %v348 = vld [vmem:[%s0 + $0x20] sm:$0xff]
        %v349 = vld [vmem:[%s0 + $0x28] sm:$0xff]
        %356 = vrot.lane.b32.xlu0 %v344, 125
        %v357 = vpop.permute.xlu0 %356
        %358 = vrot.lane.b32.xlu0 %v345, 125
        %v359 = vpop.permute.xlu0 %358
        %360 = vrot.lane.b32.xlu0 %v346, 125
        %v361 = vpop.permute.xlu0 %360
        %362 = vrot.lane.b32.xlu0 %v347, 125
        %v363 = vpop.permute.xlu0 %362
        %364 = vrot.lane.b32.xlu0 %v348, 125
        %v365 = vpop.permute.xlu0 %364
        %366 = vrot.lane.b32.xlu0 %v349, 125
        %v367 = vpop.permute.xlu0 %366
        %369 = vrot.lane.b32.xlu0 %v157, 127
        %v370 = vpop.permute.xlu0 %369
        %371 = vrot.lane.b32.xlu0 %v195, 127
        %v372 = vpop.permute.xlu0 %371
        %373 = vrot.lane.b32.xlu0 %v158, 127
        %v374 = vpop.permute.xlu0 %373
        %vm375 = vcmask 1039360
        %v376 = vsel %vm375, %v370, %v372
        %v377 = vsel %vm375, %v372, %v374
        %v378 = vsel %vm205, %v357, 0
        %v380 = vsel %vm205, %v359, 0
        %v382 = vsel %vm205, %v361, 0
        %v384 = vsel %vm205, %v363, 0
        %v386 = vsel %vm205, %v365, 0
        %v388 = vsel %vm205, %v367, 0
        %v390 = vsel %vm224, %v376, 0
        %v392 = vsel %vm224, %v377, 0
        %394 = vmatprep.subr.mxu0 %v392
        %395 = vmatpush1.msra.mxu0 %v390
        %396 = vmatprep.subr.mxu0 0.0
        %397 = vmatpush1.msra.mxu0 0.0
        %398 = vmatprep.subr.mxu0 0.0
        %399 = vmatpush1.msra.mxu0 0.0
        %400 = vmatprep.subr.mxu0 0.0
        %401 = vmatpush1.msra.mxu0 0.0
        %402 = vmatprep.subr.mxu0 0.0
        %403 = vmatpush1.msra.mxu0 0.0
        %404 = vmatprep.subr.mxu0 0.0
        %405 = vmatpush1.msra.mxu0 0.0
        %406 = vmatprep.subr.mxu0 0.0
        %407 = vmatpush1.msra.mxu0 0.0
        %408 = vmatprep.subr.mxu0 0.0
        %409 = vmatpush1.msra.mxu0 0.0
        %410 = vmatprep.subr.mxu0 0.0
        %411 = vmatpush1.msra.mxu0 0.0
        %412 = vmatprep.subr.mxu0 0.0
        %413 = vmatpush1.msra.mxu0 0.0
        %414 = vmatprep.subr.mxu0 0.0
        %415 = vmatpush1.msra.mxu0 0.0
        %416 = vmatprep.subr.mxu0 0.0
        %417 = vmatpush1.msra.mxu0 0.0
        %418 = vmatprep.subr.mxu0 0.0
        %419 = vmatpush1.msra.mxu0 0.0
        %420 = vmatprep.subr.mxu0 0.0
        %421 = vmatpush1.msra.mxu0 0.0
        %422 = vmatprep.subr.mxu0 0.0
        %423 = vmatpush1.msra.mxu0 0.0
        %424 = vmatprep.subr.mxu0 0.0
        %425 = vmatpush1.msra.mxu0 0.0
        %426 = vmatprep.subr.mxu0 0.0
        %427 = vmatpush1.msra.mxu0 0.0
        %428 = vmatprep.subr.mxu0 0.0
        %429 = vmatpush1.msra.mxu0 0.0
        %430 = vmatprep.subr.mxu0 0.0
        %431 = vmatpush1.msra.mxu0 0.0
        %432 = vmatprep.subr.mxu0 0.0
        %433 = vmatpush1.msra.mxu0 0.0
        %434 = vmatprep.subr.mxu0 0.0
        %435 = vmatpush1.msra.mxu0 0.0
        %436 = vmatprep.subr.mxu0 0.0
        %437 = vmatpush1.msra.mxu0 0.0
        %438 = vmatprep.subr.mxu0 0.0
        %439 = vmatpush1.msra.mxu0 0.0
        %440 = vmatprep.subr.mxu0 0.0
        %441 = vmatpush1.msra.mxu0 0.0
        %442 = vmatprep.subr.mxu0 0.0
        %443 = vmatpush1.msra.mxu0 0.0
        %444 = vmatprep.subr.mxu0 0.0
        %445 = vmatpush1.msra.mxu0 0.0
        %446 = vmatprep.subr.mxu0 0.0
        %447 = vmatpush1.msra.mxu0 0.0
        %448 = vmatprep.subr.mxu0 0.0
        %449 = vmatpush1.msra.mxu0 0.0
        %450 = vmatprep.subr.mxu0 0.0
        %451 = vmatpush1.msra.mxu0 0.0
        %452 = vmatprep.subr.mxu0 0.0
        %453 = vmatpush1.msra.mxu0 0.0
        %454 = vmatprep.subr.mxu0 0.0
        %455 = vmatpush1.msra.mxu0 0.0
        %456 = vmatprep.subr.mxu0 0.0
        %457 = vmatpush1.msra.mxu0 0.0
        %458 = vmatprep.mubr.f32.mxu0 0.0
        %459 = vmatmul.mubr.f32.gmra.mrb[0].mxu0 %v378
        %v460 = vpop.f32.mrb[0].mxu0
        %v461 = vadd.f32 0.0, %v460
        %v462 = vpop.f32.mrb[0].mxu0
        %v463 = vadd.f32 0.0, %v462
        %464 = vmatprep.mubr.f32.mxu0 0.0
        %465 = vmatmul.mubr.f32.gmra.mrb[0].mxu0 %v380
        %v466 = vpop.f32.mrb[0].mxu0
        %v467 = vadd.f32 0.0, %v466
        %v468 = vpop.f32.mrb[0].mxu0
        %v469 = vadd.f32 0.0, %v468
        %470 = vmatprep.mubr.f32.mxu0 0.0
        %471 = vmatmul.mubr.f32.gmra.mrb[0].mxu0 %v382
        %v472 = vpop.f32.mrb[0].mxu0
        %v473 = vadd.f32 0.0, %v472
        %v474 = vpop.f32.mrb[0].mxu0
        %v475 = vadd.f32 0.0, %v474
        %476 = vmatprep.mubr.f32.mxu0 0.0
        %477 = vmatmul.mubr.f32.gmra.mrb[0].mxu0 %v384
        %v478 = vpop.f32.mrb[0].mxu0
        %v479 = vadd.f32 0.0, %v478
        %v480 = vpop.f32.mrb[0].mxu0
        %v481 = vadd.f32 0.0, %v480
        %482 = vmatprep.mubr.f32.mxu0 0.0
        %483 = vmatmul.mubr.f32.gmra.mrb[0].mxu0 %v386
        %v484 = vpop.f32.mrb[0].mxu0
        %v485 = vadd.f32 0.0, %v484
        %v486 = vpop.f32.mrb[0].mxu0
        %v487 = vadd.f32 0.0, %v486
        %488 = vmatprep.mubr.f32.mxu0 0.0
        %489 = vmatmul.mubr.f32.gmra.mrb[0].mxu0 %v388
        %v490 = vpop.f32.mrb[0].mxu0
        %v491 = vadd.f32 0.0, %v490
        %v492 = vpop.f32.mrb[0].mxu0
        %v493 = vadd.f32 0.0, %v492
        %494 = vdwg.mxu0
        %v495 = vld [vmem:[#allocation2] sm:$0xff]
        %v496 = vld [vmem:[#allocation2 + $0x8] sm:$0xff]
        %v497 = vld [vmem:[#allocation2 + $0x10] sm:$0xff]
        %v498 = vld [vmem:[#allocation2 + $0x18] sm:$0xff]
        %v499 = vld [vmem:[#allocation2 + $0x20] sm:$0xff]
        %v500 = vld [vmem:[#allocation2 + $0x28] sm:$0xff]
        %v501 = vld [vmem:[#allocation2 + $0x30] sm:$0xff]
        %v502 = vld [vmem:[#allocation2 + $0x38] sm:$0xff]
        %v503 = vld [vmem:[#allocation2 + $0x40] sm:$0xff]
        %v504 = vld [vmem:[#allocation2 + $0x48] sm:$0xff]
        %v505 = vld [vmem:[#allocation2 + $0x50] sm:$0xff]
        %v506 = vld [vmem:[#allocation2 + $0x58] sm:$0xff]
        %v507 = vadd.f32 %v495, %v461
        %v508 = vadd.f32 %v496, %v463
        %v509 = vadd.f32 %v497, %v467
        %v510 = vadd.f32 %v498, %v469
        %v511 = vadd.f32 %v499, %v473
        %v512 = vadd.f32 %v500, %v475
        %v513 = vadd.f32 %v501, %v479
        %v514 = vadd.f32 %v502, %v481
        %v515 = vadd.f32 %v503, %v485
        %v516 = vadd.f32 %v504, %v487
        %v517 = vadd.f32 %v505, %v491
        %v518 = vadd.f32 %v506, %v493
        %519 = vst [vmem:[#allocation2] sm:$0xff] %v507
        %520 = vst [vmem:[#allocation2 + $0x8] sm:$0xff] %v508
        %521 = vst [vmem:[#allocation2 + $0x10] sm:$0xff] %v509
        %522 = vst [vmem:[#allocation2 + $0x18] sm:$0xff] %v510
        %523 = vst [vmem:[#allocation2 + $0x20] sm:$0xff] %v511
        %524 = vst [vmem:[#allocation2 + $0x28] sm:$0xff] %v512
        %525 = vst [vmem:[#allocation2 + $0x30] sm:$0xff] %v513
        %526 = vst [vmem:[#allocation2 + $0x38] sm:$0xff] %v514
        %527 = vst [vmem:[#allocation2 + $0x40] sm:$0xff] %v515
        %528 = vst [vmem:[#allocation2 + $0x48] sm:$0xff] %v516
        %529 = vst [vmem:[#allocation2 + $0x50] sm:$0xff] %v517
        %530 = vst [vmem:[#allocation2 + $0x58] sm:$0xff] %v518
        %v531 = vsel %vm188, 1, 0
        %v532 = vsel %vm189, 1, 0
        %vm533 = vcmp.eq.s32.totalorder %v531, 1
        %vm534 = vcmp.eq.s32.totalorder %v532, 1
        %535 = vrot.lane.b32.xlu0 %v157, 126
        %v536 = vpop.permute.xlu0 %535
        %537 = vrot.lane.b32.xlu0 %v195, 126
        %v538 = vpop.permute.xlu0 %537
        %539 = vrot.lane.b32.xlu0 %v158, 126
        %v540 = vpop.permute.xlu0 %539
        %vm541 = vcmask 1031168
        %v542 = vsel %vm541, %v536, %v538
        %v543 = vsel %vm541, %v538, %v540
        %v546 = vsel %vm533, %v542, 0.0
        %v547 = vsel %vm534, %v543, 0.0
        %v548 = vld [vmem:[%s0] sm:$0xff]
        %v549 = vld [vmem:[%s0 + $0x8] sm:$0xff]
        %v550 = vld [vmem:[%s0 + $0x10] sm:$0xff]
        %v551 = vld [vmem:[%s0 + $0x18] sm:$0xff]
        %v552 = vld [vmem:[%s0 + $0x20] sm:$0xff]
        %v553 = vld [vmem:[%s0 + $0x28] sm:$0xff]
        %560 = vrot.lane.b32.xlu0 %v548, 122
        %v561 = vpop.permute.xlu0 %560
        %562 = vrot.lane.b32.xlu0 %v549, 122
        %v563 = vpop.permute.xlu0 %562
        %564 = vrot.lane.b32.xlu0 %v550, 122
        %v565 = vpop.permute.xlu0 %564
        %566 = vrot.lane.b32.xlu0 %v551, 122
        %v567 = vpop.permute.xlu0 %566
        %568 = vrot.lane.b32.xlu0 %v552, 122
        %v569 = vpop.permute.xlu0 %568
        %570 = vrot.lane.b32.xlu0 %v553, 122
        %v571 = vpop.permute.xlu0 %570
        %v572 = vsel %vm205, %v561, 0
        %v574 = vsel %vm205, %v563, 0
        %v576 = vsel %vm205, %v565, 0
        %v578 = vsel %vm205, %v567, 0
        %v580 = vsel %vm205, %v569, 0
        %v582 = vsel %vm205, %v571, 0
        %v585 = vsel %vm224, %v546, 0
        %v588 = vsel %vm224, %v547, 0
        %590 = vmatprep.subr.mxu0 %v588
        %591 = vmatpush1.msra.mxu0 %v585
        %592 = vmatprep.subr.mxu0 0.0
        %593 = vmatpush1.msra.mxu0 0.0
        %594 = vmatprep.subr.mxu0 0.0
        %595 = vmatpush1.msra.mxu0 0.0
        %596 = vmatprep.subr.mxu0 0.0
        %597 = vmatpush1.msra.mxu0 0.0
        %598 = vmatprep.subr.mxu0 0.0
        %599 = vmatpush1.msra.mxu0 0.0
        %600 = vmatprep.subr.mxu0 0.0
        %601 = vmatpush1.msra.mxu0 0.0
        %602 = vmatprep.subr.mxu0 0.0
        %603 = vmatpush1.msra.mxu0 0.0
        %604 = vmatprep.subr.mxu0 0.0
        %605 = vmatpush1.msra.mxu0 0.0
        %606 = vmatprep.subr.mxu0 0.0
        %607 = vmatpush1.msra.mxu0 0.0
        %608 = vmatprep.subr.mxu0 0.0
        %609 = vmatpush1.msra.mxu0 0.0
        %610 = vmatprep.subr.mxu0 0.0
        %611 = vmatpush1.msra.mxu0 0.0
        %612 = vmatprep.subr.mxu0 0.0
        %613 = vmatpush1.msra.mxu0 0.0
        %614 = vmatprep.subr.mxu0 0.0
        %615 = vmatpush1.msra.mxu0 0.0
        %616 = vmatprep.subr.mxu0 0.0
        %617 = vmatpush1.msra.mxu0 0.0
        %618 = vmatprep.subr.mxu0 0.0
        %619 = vmatpush1.msra.mxu0 0.0
        %620 = vmatprep.subr.mxu0 0.0
        %621 = vmatpush1.msra.mxu0 0.0
        %622 = vmatprep.subr.mxu0 0.0
        %623 = vmatpush1.msra.mxu0 0.0
        %624 = vmatprep.subr.mxu0 0.0
        %625 = vmatpush1.msra.mxu0 0.0
        %626 = vmatprep.subr.mxu0 0.0
        %627 = vmatpush1.msra.mxu0 0.0
        %628 = vmatprep.subr.mxu0 0.0
        %629 = vmatpush1.msra.mxu0 0.0
        %630 = vmatprep.subr.mxu0 0.0
        %631 = vmatpush1.msra.mxu0 0.0
        %632 = vmatprep.subr.mxu0 0.0
        %633 = vmatpush1.msra.mxu0 0.0
        %634 = vmatprep.subr.mxu0 0.0
        %635 = vmatpush1.msra.mxu0 0.0
        %636 = vmatprep.subr.mxu0 0.0
        %637 = vmatpush1.msra.mxu0 0.0
        %638 = vmatprep.subr.mxu0 0.0
        %639 = vmatpush1.msra.mxu0 0.0
        %640 = vmatprep.subr.mxu0 0.0
        %641 = vmatpush1.msra.mxu0 0.0
        %642 = vmatprep.subr.mxu0 0.0
        %643 = vmatpush1.msra.mxu0 0.0
        %644 = vmatprep.subr.mxu0 0.0
        %645 = vmatpush1.msra.mxu0 0.0
        %646 = vmatprep.subr.mxu0 0.0
        %647 = vmatpush1.msra.mxu0 0.0
        %648 = vmatprep.subr.mxu0 0.0
        %649 = vmatpush1.msra.mxu0 0.0
        %650 = vmatprep.subr.mxu0 0.0
        %651 = vmatpush1.msra.mxu0 0.0
        %652 = vmatprep.subr.mxu0 0.0
        %653 = vmatpush1.msra.mxu0 0.0
        %654 = vmatprep.mubr.f32.mxu0 0.0
        %655 = vmatmul.mubr.f32.gmra.mrb[0].mxu0 %v572
        %v656 = vpop.f32.mrb[0].mxu0
        %v657 = vadd.f32 0.0, %v656
        %v658 = vpop.f32.mrb[0].mxu0
        %v659 = vadd.f32 0.0, %v658
        %660 = vmatprep.mubr.f32.mxu0 0.0
        %661 = vmatmul.mubr.f32.gmra.mrb[0].mxu0 %v574
        %v662 = vpop.f32.mrb[0].mxu0
        %v663 = vadd.f32 0.0, %v662
        %v664 = vpop.f32.mrb[0].mxu0
        %v665 = vadd.f32 0.0, %v664
        %666 = vmatprep.mubr.f32.mxu0 0.0
        %667 = vmatmul.mubr.f32.gmra.mrb[0].mxu0 %v576
        %v668 = vpop.f32.mrb[0].mxu0
        %v669 = vadd.f32 0.0, %v668
        %v670 = vpop.f32.mrb[0].mxu0
        %v671 = vadd.f32 0.0, %v670
        %672 = vmatprep.mubr.f32.mxu0 0.0
        %673 = vmatmul.mubr.f32.gmra.mrb[0].mxu0 %v578
        %v674 = vpop.f32.mrb[0].mxu0
        %v675 = vadd.f32 0.0, %v674
        %v676 = vpop.f32.mrb[0].mxu0
        %v677 = vadd.f32 0.0, %v676
        %678 = vmatprep.mubr.f32.mxu0 0.0
        %679 = vmatmul.mubr.f32.gmra.mrb[0].mxu0 %v580
        %v680 = vpop.f32.mrb[0].mxu0
        %v681 = vadd.f32 0.0, %v680
        %v682 = vpop.f32.mrb[0].mxu0
        %v683 = vadd.f32 0.0, %v682
        %684 = vmatprep.mubr.f32.mxu0 0.0
        %685 = vmatmul.mubr.f32.gmra.mrb[0].mxu0 %v582
        %v686 = vpop.f32.mrb[0].mxu0
        %v687 = vadd.f32 0.0, %v686
        %v688 = vpop.f32.mrb[0].mxu0
        %v689 = vadd.f32 0.0, %v688
        %690 = vdwg.mxu0
        %v691 = vld [vmem:[#allocation2] sm:$0xff]
        %v692 = vld [vmem:[#allocation2 + $0x8] sm:$0xff]
        %v693 = vld [vmem:[#allocation2 + $0x10] sm:$0xff]
        %v694 = vld [vmem:[#allocation2 + $0x18] sm:$0xff]
        %v695 = vld [vmem:[#allocation2 + $0x20] sm:$0xff]
        %v696 = vld [vmem:[#allocation2 + $0x28] sm:$0xff]
        %v697 = vld [vmem:[#allocation2 + $0x30] sm:$0xff]
        %v698 = vld [vmem:[#allocation2 + $0x38] sm:$0xff]
        %v699 = vld [vmem:[#allocation2 + $0x40] sm:$0xff]
        %v700 = vld [vmem:[#allocation2 + $0x48] sm:$0xff]
        %v701 = vld [vmem:[#allocation2 + $0x50] sm:$0xff]
        %v702 = vld [vmem:[#allocation2 + $0x58] sm:$0xff]
        %v703 = vadd.f32 %v691, %v657
        %v704 = vadd.f32 %v692, %v659
        %v705 = vadd.f32 %v693, %v663
        %v706 = vadd.f32 %v694, %v665
        %v707 = vadd.f32 %v695, %v669
        %v708 = vadd.f32 %v696, %v671
        %v709 = vadd.f32 %v697, %v675
        %v710 = vadd.f32 %v698, %v677
        %v711 = vadd.f32 %v699, %v681
        %v712 = vadd.f32 %v700, %v683
        %v713 = vadd.f32 %v701, %v687
        %v714 = vadd.f32 %v702, %v689
        %715 = vst [vmem:[#allocation2] sm:$0xff] %v703
        %716 = vst [vmem:[#allocation2 + $0x8] sm:$0xff] %v704
        %717 = vst [vmem:[#allocation2 + $0x10] sm:$0xff] %v705
        %718 = vst [vmem:[#allocation2 + $0x18] sm:$0xff] %v706
        %719 = vst [vmem:[#allocation2 + $0x20] sm:$0xff] %v707
        %720 = vst [vmem:[#allocation2 + $0x28] sm:$0xff] %v708
        %721 = vst [vmem:[#allocation2 + $0x30] sm:$0xff] %v709
        %722 = vst [vmem:[#allocation2 + $0x38] sm:$0xff] %v710
        %723 = vst [vmem:[#allocation2 + $0x40] sm:$0xff] %v711
        %724 = vst [vmem:[#allocation2 + $0x48] sm:$0xff] %v712
        %725 = vst [vmem:[#allocation2 + $0x50] sm:$0xff] %v713
        %726 = vst [vmem:[#allocation2 + $0x58] sm:$0xff] %v714
        %727 = vrot.lane.b32.xlu0 %v157, 112
        %v728 = vpop.permute.xlu0 %727
        %729 = vrot.lane.b32.xlu0 %v195, 112
        %v730 = vpop.permute.xlu0 %729
        %731 = vrot.lane.b32.xlu0 %v158, 112
        %v732 = vpop.permute.xlu0 %731
        %vm733 = vcmask 916480
        %v734 = vsel %vm733, %v728, %v730
        %v735 = vsel %vm733, %v730, %v732
        %v738 = vsel %vm192, %v734, 0.0
        %v739 = vsel %vm193, %v735, 0.0
        %v740 = vld [vmem:[%s0] sm:$0xff]
        %v741 = vld [vmem:[%s0 + $0x8] sm:$0xff]
        %v742 = vld [vmem:[%s0 + $0x10] sm:$0xff]
        %v743 = vld [vmem:[%s0 + $0x18] sm:$0xff]
        %v744 = vld [vmem:[%s0 + $0x20] sm:$0xff]
        %v745 = vld [vmem:[%s0 + $0x28] sm:$0xff]
        %752 = vrot.lane.b32.xlu0 %v740, 119
        %v753 = vpop.permute.xlu0 %752
        %754 = vrot.lane.b32.xlu0 %v741, 119
        %v755 = vpop.permute.xlu0 %754
        %756 = vrot.lane.b32.xlu0 %v742, 119
        %v757 = vpop.permute.xlu0 %756
        %758 = vrot.lane.b32.xlu0 %v743, 119
        %v759 = vpop.permute.xlu0 %758
        %760 = vrot.lane.b32.xlu0 %v744, 119
        %v761 = vpop.permute.xlu0 %760
        %762 = vrot.lane.b32.xlu0 %v745, 119
        %v763 = vpop.permute.xlu0 %762
        %v764 = vsel %vm205, %v753, 0
        %v766 = vsel %vm205, %v755, 0
        %v768 = vsel %vm205, %v757, 0
        %v770 = vsel %vm205, %v759, 0
        %v772 = vsel %vm205, %v761, 0
        %v774 = vsel %vm205, %v763, 0
        %v777 = vsel %vm224, %v738, 0
        %v780 = vsel %vm224, %v739, 0
        %782 = vmatprep.subr.mxu0 %v780
        %783 = vmatpush1.msra.mxu0 %v777
        %784 = vmatprep.subr.mxu0 0.0
        %785 = vmatpush1.msra.mxu0 0.0
        %786 = vmatprep.subr.mxu0 0.0
        %787 = vmatpush1.msra.mxu0 0.0
        %788 = vmatprep.subr.mxu0 0.0
        %789 = vmatpush1.msra.mxu0 0.0
        %790 = vmatprep.subr.mxu0 0.0
        %791 = vmatpush1.msra.mxu0 0.0
        %792 = vmatprep.subr.mxu0 0.0
        %793 = vmatpush1.msra.mxu0 0.0
        %794 = vmatprep.subr.mxu0 0.0
        %795 = vmatpush1.msra.mxu0 0.0
        %796 = vmatprep.subr.mxu0 0.0
        %797 = vmatpush1.msra.mxu0 0.0
        %798 = vmatprep.subr.mxu0 0.0
        %799 = vmatpush1.msra.mxu0 0.0
        %800 = vmatprep.subr.mxu0 0.0
        %801 = vmatpush1.msra.mxu0 0.0
        %802 = vmatprep.subr.mxu0 0.0
        %803 = vmatpush1.msra.mxu0 0.0
        %804 = vmatprep.subr.mxu0 0.0
        %805 = vmatpush1.msra.mxu0 0.0
        %806 = vmatprep.subr.mxu0 0.0
        %807 = vmatpush1.msra.mxu0 0.0
        %808 = vmatprep.subr.mxu0 0.0
        %809 = vmatpush1.msra.mxu0 0.0
        %810 = vmatprep.subr.mxu0 0.0
        %811 = vmatpush1.msra.mxu0 0.0
        %812 = vmatprep.subr.mxu0 0.0
        %813 = vmatpush1.msra.mxu0 0.0
        %814 = vmatprep.subr.mxu0 0.0
        %815 = vmatpush1.msra.mxu0 0.0
        %816 = vmatprep.subr.mxu0 0.0
        %817 = vmatpush1.msra.mxu0 0.0
        %818 = vmatprep.subr.mxu0 0.0
        %819 = vmatpush1.msra.mxu0 0.0
        %820 = vmatprep.subr.mxu0 0.0
        %821 = vmatpush1.msra.mxu0 0.0
        %822 = vmatprep.subr.mxu0 0.0
        %823 = vmatpush1.msra.mxu0 0.0
        %824 = vmatprep.subr.mxu0 0.0
        %825 = vmatpush1.msra.mxu0 0.0
        %826 = vmatprep.subr.mxu0 0.0
        %827 = vmatpush1.msra.mxu0 0.0
        %828 = vmatprep.subr.mxu0 0.0
        %829 = vmatpush1.msra.mxu0 0.0
        %830 = vmatprep.subr.mxu0 0.0
        %831 = vmatpush1.msra.mxu0 0.0
        %832 = vmatprep.subr.mxu0 0.0
        %833 = vmatpush1.msra.mxu0 0.0
        %834 = vmatprep.subr.mxu0 0.0
        %835 = vmatpush1.msra.mxu0 0.0
        %836 = vmatprep.subr.mxu0 0.0
        %837 = vmatpush1.msra.mxu0 0.0
        %838 = vmatprep.subr.mxu0 0.0
        %839 = vmatpush1.msra.mxu0 0.0
        %840 = vmatprep.subr.mxu0 0.0
        %841 = vmatpush1.msra.mxu0 0.0
        %842 = vmatprep.subr.mxu0 0.0
        %843 = vmatpush1.msra.mxu0 0.0
        %844 = vmatprep.subr.mxu0 0.0
        %845 = vmatpush1.msra.mxu0 0.0
        %846 = vmatprep.mubr.f32.mxu0 0.0
        %847 = vmatmul.mubr.f32.gmra.mrb[0].mxu0 %v764
        %v848 = vpop.f32.mrb[0].mxu0
        %v849 = vadd.f32 0.0, %v848
        %v850 = vpop.f32.mrb[0].mxu0
        %v851 = vadd.f32 0.0, %v850
        %852 = vmatprep.mubr.f32.mxu0 0.0
        %853 = vmatmul.mubr.f32.gmra.mrb[0].mxu0 %v766
        %v854 = vpop.f32.mrb[0].mxu0
        %v855 = vadd.f32 0.0, %v854
        %v856 = vpop.f32.mrb[0].mxu0
        %v857 = vadd.f32 0.0, %v856
        %858 = vmatprep.mubr.f32.mxu0 0.0
        %859 = vmatmul.mubr.f32.gmra.mrb[0].mxu0 %v768
        %v860 = vpop.f32.mrb[0].mxu0
        %v861 = vadd.f32 0.0, %v860
        %v862 = vpop.f32.mrb[0].mxu0
        %v863 = vadd.f32 0.0, %v862
        %864 = vmatprep.mubr.f32.mxu0 0.0
        %865 = vmatmul.mubr.f32.gmra.mrb[0].mxu0 %v770
        %v866 = vpop.f32.mrb[0].mxu0
        %v867 = vadd.f32 0.0, %v866
        %v868 = vpop.f32.mrb[0].mxu0
        %v869 = vadd.f32 0.0, %v868
        %870 = vmatprep.mubr.f32.mxu0 0.0
        %871 = vmatmul.mubr.f32.gmra.mrb[0].mxu0 %v772
        %v872 = vpop.f32.mrb[0].mxu0
        %v873 = vadd.f32 0.0, %v872
        %v874 = vpop.f32.mrb[0].mxu0
        %v875 = vadd.f32 0.0, %v874
        %876 = vmatprep.mubr.f32.mxu0 0.0
        %877 = vmatmul.mubr.f32.gmra.mrb[0].mxu0 %v774
        %v878 = vpop.f32.mrb[0].mxu0
        %v879 = vadd.f32 0.0, %v878
        %v880 = vpop.f32.mrb[0].mxu0
        %v881 = vadd.f32 0.0, %v880
        %882 = vdwg.mxu0
        %v883 = vld [vmem:[#allocation2] sm:$0xff]
        %v884 = vld [vmem:[#allocation2 + $0x8] sm:$0xff]
        %v885 = vld [vmem:[#allocation2 + $0x10] sm:$0xff]
        %v886 = vld [vmem:[#allocation2 + $0x18] sm:$0xff]
        %v887 = vld [vmem:[#allocation2 + $0x20] sm:$0xff]
        %v888 = vld [vmem:[#allocation2 + $0x28] sm:$0xff]
        %v889 = vld [vmem:[#allocation2 + $0x30] sm:$0xff]
        %v890 = vld [vmem:[#allocation2 + $0x38] sm:$0xff]
        %v891 = vld [vmem:[#allocation2 + $0x40] sm:$0xff]
        %v892 = vld [vmem:[#allocation2 + $0x48] sm:$0xff]
        %v893 = vld [vmem:[#allocation2 + $0x50] sm:$0xff]
        %v894 = vld [vmem:[#allocation2 + $0x58] sm:$0xff]
        %v895 = vadd.f32 %v883, %v849
        %v896 = vadd.f32 %v884, %v851
        %v897 = vadd.f32 %v885, %v855
        %v898 = vadd.f32 %v886, %v857
        %v899 = vadd.f32 %v887, %v861
        %v900 = vadd.f32 %v888, %v863
        %v901 = vadd.f32 %v889, %v867
        %v902 = vadd.f32 %v890, %v869
        %v903 = vadd.f32 %v891, %v873
        %v904 = vadd.f32 %v892, %v875
        %v905 = vadd.f32 %v893, %v879
        %v906 = vadd.f32 %v894, %v881
        %907 = vst [vmem:[#allocation2] sm:$0xff] %v895
        %908 = vst [vmem:[#allocation2 + $0x8] sm:$0xff] %v896
        %909 = vst [vmem:[#allocation2 + $0x10] sm:$0xff] %v897
        %910 = vst [vmem:[#allocation2 + $0x18] sm:$0xff] %v898
        %911 = vst [vmem:[#allocation2 + $0x20] sm:$0xff] %v899
        %912 = vst [vmem:[#allocation2 + $0x28] sm:$0xff] %v900
        %913 = vst [vmem:[#allocation2 + $0x30] sm:$0xff] %v901
        %914 = vst [vmem:[#allocation2 + $0x38] sm:$0xff] %v902
        %915 = vst [vmem:[#allocation2 + $0x40] sm:$0xff] %v903
        %916 = vst [vmem:[#allocation2 + $0x48] sm:$0xff] %v904
        %917 = vst [vmem:[#allocation2 + $0x50] sm:$0xff] %v905
        %918 = vst [vmem:[#allocation2 + $0x58] sm:$0xff] %v906
        %v919 = vld [vmem:[%s0] sm:$0xff]
        %v920 = vld [vmem:[%s0 + $0x8] sm:$0xff]
        %v921 = vld [vmem:[%s0 + $0x10] sm:$0xff]
        %v922 = vld [vmem:[%s0 + $0x18] sm:$0xff]
        %v923 = vld [vmem:[%s0 + $0x20] sm:$0xff]
        %v924 = vld [vmem:[%s0 + $0x28] sm:$0xff]
        %931 = vrot.lane.b32.xlu0 %v919, 116
        %v932 = vpop.permute.xlu0 %931
        %933 = vrot.lane.b32.xlu0 %v920, 116
        %v934 = vpop.permute.xlu0 %933
        %935 = vrot.lane.b32.xlu0 %v921, 116
        %v936 = vpop.permute.xlu0 %935
        %937 = vrot.lane.b32.xlu0 %v922, 116
        %v938 = vpop.permute.xlu0 %937
        %939 = vrot.lane.b32.xlu0 %v923, 116
        %v940 = vpop.permute.xlu0 %939
        %941 = vrot.lane.b32.xlu0 %v924, 116
        %v942 = vpop.permute.xlu0 %941
        %943 = vrot.lane.b32.xlu0 %v157, 111
        %v944 = vpop.permute.xlu0 %943
        %945 = vrot.lane.b32.xlu0 %v195, 111
        %v946 = vpop.permute.xlu0 %945
        %947 = vrot.lane.b32.xlu0 %v158, 111
        %v948 = vpop.permute.xlu0 %947
        %vm949 = vcmask 908288
        %v950 = vsel %vm949, %v944, %v946
        %v951 = vsel %vm949, %v946, %v948
        %v952 = vsel %vm205, %v932, 0
        %v954 = vsel %vm205, %v934, 0
        %v956 = vsel %vm205, %v936, 0
        %v958 = vsel %vm205, %v938, 0
        %v960 = vsel %vm205, %v940, 0
        %v962 = vsel %vm205, %v942, 0
        %v964 = vsel %vm224, %v950, 0
        %v966 = vsel %vm224, %v951, 0
        %968 = vmatprep.subr.mxu0 %v966
        %969 = vmatpush1.msra.mxu0 %v964
        %970 = vmatprep.subr.mxu0 0.0
        %971 = vmatpush1.msra.mxu0 0.0
        %972 = vmatprep.subr.mxu0 0.0
        %973 = vmatpush1.msra.mxu0 0.0
        %974 = vmatprep.subr.mxu0 0.0
        %975 = vmatpush1.msra.mxu0 0.0
        %976 = vmatprep.subr.mxu0 0.0
        %977 = vmatpush1.msra.mxu0 0.0
        %978 = vmatprep.subr.mxu0 0.0
        %979 = vmatpush1.msra.mxu0 0.0
        %980 = vmatprep.subr.mxu0 0.0
        %981 = vmatpush1.msra.mxu0 0.0
        %982 = vmatprep.subr.mxu0 0.0
        %983 = vmatpush1.msra.mxu0 0.0
        %984 = vmatprep.subr.mxu0 0.0
        %985 = vmatpush1.msra.mxu0 0.0
        %986 = vmatprep.subr.mxu0 0.0
        %987 = vmatpush1.msra.mxu0 0.0
        %988 = vmatprep.subr.mxu0 0.0
        %989 = vmatpush1.msra.mxu0 0.0
        %990 = vmatprep.subr.mxu0 0.0
        %991 = vmatpush1.msra.mxu0 0.0
        %992 = vmatprep.subr.mxu0 0.0
        %993 = vmatpush1.msra.mxu0 0.0
        %994 = vmatprep.subr.mxu0 0.0
        %995 = vmatpush1.msra.mxu0 0.0
        %996 = vmatprep.subr.mxu0 0.0
        %997 = vmatpush1.msra.mxu0 0.0
        %998 = vmatprep.subr.mxu0 0.0
        %999 = vmatpush1.msra.mxu0 0.0
        %1000 = vmatprep.subr.mxu0 0.0
        %1001 = vmatpush1.msra.mxu0 0.0
        %1002 = vmatprep.subr.mxu0 0.0
        %1003 = vmatpush1.msra.mxu0 0.0
        %1004 = vmatprep.subr.mxu0 0.0
        %1005 = vmatpush1.msra.mxu0 0.0
        %1006 = vmatprep.subr.mxu0 0.0
        %1007 = vmatpush1.msra.mxu0 0.0
        %1008 = vmatprep.subr.mxu0 0.0
        %1009 = vmatpush1.msra.mxu0 0.0
        %1010 = vmatprep.subr.mxu0 0.0
        %1011 = vmatpush1.msra.mxu0 0.0
        %1012 = vmatprep.subr.mxu0 0.0
        %1013 = vmatpush1.msra.mxu0 0.0
        %1014 = vmatprep.subr.mxu0 0.0
        %1015 = vmatpush1.msra.mxu0 0.0
        %1016 = vmatprep.subr.mxu0 0.0
        %1017 = vmatpush1.msra.mxu0 0.0
        %1018 = vmatprep.subr.mxu0 0.0
        %1019 = vmatpush1.msra.mxu0 0.0
        %1020 = vmatprep.subr.mxu0 0.0
        %1021 = vmatpush1.msra.mxu0 0.0
        %1022 = vmatprep.subr.mxu0 0.0
        %1023 = vmatpush1.msra.mxu0 0.0
        %1024 = vmatprep.subr.mxu0 0.0
        %1025 = vmatpush1.msra.mxu0 0.0
        %1026 = vmatprep.subr.mxu0 0.0
        %1027 = vmatpush1.msra.mxu0 0.0
        %1028 = vmatprep.subr.mxu0 0.0
        %1029 = vmatpush1.msra.mxu0 0.0
        %1030 = vmatprep.subr.mxu0 0.0
        %1031 = vmatpush1.msra.mxu0 0.0
        %1032 = vmatprep.mubr.f32.mxu0 0.0
        %1033 = vmatmul.mubr.f32.gmra.mrb[0].mxu0 %v952
        %v1034 = vpop.f32.mrb[0].mxu0
        %v1035 = vadd.f32 0.0, %v1034
        %v1036 = vpop.f32.mrb[0].mxu0
        %v1037 = vadd.f32 0.0, %v1036
        %1038 = vmatprep.mubr.f32.mxu0 0.0
        %1039 = vmatmul.mubr.f32.gmra.mrb[0].mxu0 %v954
        %v1040 = vpop.f32.mrb[0].mxu0
        %v1041 = vadd.f32 0.0, %v1040
        %v1042 = vpop.f32.mrb[0].mxu0
        %v1043 = vadd.f32 0.0, %v1042
        %1044 = vmatprep.mubr.f32.mxu0 0.0
        %1045 = vmatmul.mubr.f32.gmra.mrb[0].mxu0 %v956
        %v1046 = vpop.f32.mrb[0].mxu0
        %v1047 = vadd.f32 0.0, %v1046
        %v1048 = vpop.f32.mrb[0].mxu0
        %v1049 = vadd.f32 0.0, %v1048
        %1050 = vmatprep.mubr.f32.mxu0 0.0
        %1051 = vmatmul.mubr.f32.gmra.mrb[0].mxu0 %v958
        %v1052 = vpop.f32.mrb[0].mxu0
        %v1053 = vadd.f32 0.0, %v1052
        %v1054 = vpop.f32.mrb[0].mxu0
        %v1055 = vadd.f32 0.0, %v1054
        %1056 = vmatprep.mubr.f32.mxu0 0.0
        %1057 = vmatmul.mubr.f32.gmra.mrb[0].mxu0 %v960
        %v1058 = vpop.f32.mrb[0].mxu0
        %v1059 = vadd.f32 0.0, %v1058
        %v1060 = vpop.f32.mrb[0].mxu0
        %v1061 = vadd.f32 0.0, %v1060
        %1062 = vmatprep.mubr.f32.mxu0 0.0
        %1063 = vmatmul.mubr.f32.gmra.mrb[0].mxu0 %v962
        %v1064 = vpop.f32.mrb[0].mxu0
        %v1065 = vadd.f32 0.0, %v1064
        %v1066 = vpop.f32.mrb[0].mxu0
        %v1067 = vadd.f32 0.0, %v1066
        %1068 = vdwg.mxu0
        %v1069 = vld [vmem:[#allocation2] sm:$0xff]
        %v1070 = vld [vmem:[#allocation2 + $0x8] sm:$0xff]
        %v1071 = vld [vmem:[#allocation2 + $0x10] sm:$0xff]
        %v1072 = vld [vmem:[#allocation2 + $0x18] sm:$0xff]
        %v1073 = vld [vmem:[#allocation2 + $0x20] sm:$0xff]
        %v1074 = vld [vmem:[#allocation2 + $0x28] sm:$0xff]
        %v1075 = vld [vmem:[#allocation2 + $0x30] sm:$0xff]
        %v1076 = vld [vmem:[#allocation2 + $0x38] sm:$0xff]
        %v1077 = vld [vmem:[#allocation2 + $0x40] sm:$0xff]
        %v1078 = vld [vmem:[#allocation2 + $0x48] sm:$0xff]
        %v1079 = vld [vmem:[#allocation2 + $0x50] sm:$0xff]
        %v1080 = vld [vmem:[#allocation2 + $0x58] sm:$0xff]
        %v1081 = vadd.f32 %v1069, %v1035
        %v1082 = vadd.f32 %v1070, %v1037
        %v1083 = vadd.f32 %v1071, %v1041
        %v1084 = vadd.f32 %v1072, %v1043
        %v1085 = vadd.f32 %v1073, %v1047
        %v1086 = vadd.f32 %v1074, %v1049
        %v1087 = vadd.f32 %v1075, %v1053
        %v1088 = vadd.f32 %v1076, %v1055
        %v1089 = vadd.f32 %v1077, %v1059
        %v1090 = vadd.f32 %v1078, %v1061
        %v1091 = vadd.f32 %v1079, %v1065
        %v1092 = vadd.f32 %v1080, %v1067
        %1093 = vst [vmem:[#allocation2] sm:$0xff] %v1081
        %1094 = vst [vmem:[#allocation2 + $0x8] sm:$0xff] %v1082
        %1095 = vst [vmem:[#allocation2 + $0x10] sm:$0xff] %v1083
        %1096 = vst [vmem:[#allocation2 + $0x18] sm:$0xff] %v1084
        %1097 = vst [vmem:[#allocation2 + $0x20] sm:$0xff] %v1085
        %1098 = vst [vmem:[#allocation2 + $0x28] sm:$0xff] %v1086
        %1099 = vst [vmem:[#allocation2 + $0x30] sm:$0xff] %v1087
        %1100 = vst [vmem:[#allocation2 + $0x38] sm:$0xff] %v1088
        %1101 = vst [vmem:[#allocation2 + $0x40] sm:$0xff] %v1089
        %1102 = vst [vmem:[#allocation2 + $0x48] sm:$0xff] %v1090
        %1103 = vst [vmem:[#allocation2 + $0x50] sm:$0xff] %v1091
        %1104 = vst [vmem:[#allocation2 + $0x58] sm:$0xff] %v1092
        %1105 = vrot.lane.b32.xlu0 %v157, 110
        %v1106 = vpop.permute.xlu0 %1105
        %1107 = vrot.lane.b32.xlu0 %v195, 110
        %v1108 = vpop.permute.xlu0 %1107
        %1109 = vrot.lane.b32.xlu0 %v158, 110
        %v1110 = vpop.permute.xlu0 %1109
        %vm1111 = vcmask 900096
        %v1112 = vsel %vm1111, %v1106, %v1108
        %v1113 = vsel %vm1111, %v1108, %v1110
        %v1116 = vsel %vm533, %v1112, 0.0
        %v1117 = vsel %vm534, %v1113, 0.0
        %v1118 = vld [vmem:[%s0] sm:$0xff]
        %v1119 = vld [vmem:[%s0 + $0x8] sm:$0xff]
        %v1120 = vld [vmem:[%s0 + $0x10] sm:$0xff]
        %v1121 = vld [vmem:[%s0 + $0x18] sm:$0xff]
        %v1122 = vld [vmem:[%s0 + $0x20] sm:$0xff]
        %v1123 = vld [vmem:[%s0 + $0x28] sm:$0xff]
        %1130 = vrot.lane.b32.xlu0 %v1118, 113
        %v1131 = vpop.permute.xlu0 %1130
        %1132 = vrot.lane.b32.xlu0 %v1119, 113
        %v1133 = vpop.permute.xlu0 %1132
        %1134 = vrot.lane.b32.xlu0 %v1120, 113
        %v1135 = vpop.permute.xlu0 %1134
        %1136 = vrot.lane.b32.xlu0 %v1121, 113
        %v1137 = vpop.permute.xlu0 %1136
        %1138 = vrot.lane.b32.xlu0 %v1122, 113
        %v1139 = vpop.permute.xlu0 %1138
        %1140 = vrot.lane.b32.xlu0 %v1123, 113
        %v1141 = vpop.permute.xlu0 %1140
        %v1142 = vsel %vm205, %v1131, 0
        %v1144 = vsel %vm205, %v1133, 0
        %v1146 = vsel %vm205, %v1135, 0
        %v1148 = vsel %vm205, %v1137, 0
        %v1150 = vsel %vm205, %v1139, 0
        %v1152 = vsel %vm205, %v1141, 0
        %v1155 = vsel %vm224, %v1116, 0
        %v1158 = vsel %vm224, %v1117, 0
        %1160 = vmatprep.subr.mxu0 %v1158
        %1161 = vmatpush1.msra.mxu0 %v1155
        %1162 = vmatprep.subr.mxu0 0.0
        %1163 = vmatpush1.msra.mxu0 0.0
        %1164 = vmatprep.subr.mxu0 0.0
        %1165 = vmatpush1.msra.mxu0 0.0
        %1166 = vmatprep.subr.mxu0 0.0
        %1167 = vmatpush1.msra.mxu0 0.0
        %1168 = vmatprep.subr.mxu0 0.0
        %1169 = vmatpush1.msra.mxu0 0.0
        %1170 = vmatprep.subr.mxu0 0.0
        %1171 = vmatpush1.msra.mxu0 0.0
        %1172 = vmatprep.subr.mxu0 0.0
        %1173 = vmatpush1.msra.mxu0 0.0
        %1174 = vmatprep.subr.mxu0 0.0
        %1175 = vmatpush1.msra.mxu0 0.0
        %1176 = vmatprep.subr.mxu0 0.0
        %1177 = vmatpush1.msra.mxu0 0.0
        %1178 = vmatprep.subr.mxu0 0.0
        %1179 = vmatpush1.msra.mxu0 0.0
        %1180 = vmatprep.subr.mxu0 0.0
        %1181 = vmatpush1.msra.mxu0 0.0
        %1182 = vmatprep.subr.mxu0 0.0
        %1183 = vmatpush1.msra.mxu0 0.0
        %1184 = vmatprep.subr.mxu0 0.0
        %1185 = vmatpush1.msra.mxu0 0.0
        %1186 = vmatprep.subr.mxu0 0.0
        %1187 = vmatpush1.msra.mxu0 0.0
        %1188 = vmatprep.subr.mxu0 0.0
        %1189 = vmatpush1.msra.mxu0 0.0
        %1190 = vmatprep.subr.mxu0 0.0
        %1191 = vmatpush1.msra.mxu0 0.0
        %1192 = vmatprep.subr.mxu0 0.0
        %1193 = vmatpush1.msra.mxu0 0.0
        %1194 = vmatprep.subr.mxu0 0.0
        %1195 = vmatpush1.msra.mxu0 0.0
        %1196 = vmatprep.subr.mxu0 0.0
        %1197 = vmatpush1.msra.mxu0 0.0
        %1198 = vmatprep.subr.mxu0 0.0
        %1199 = vmatpush1.msra.mxu0 0.0
        %1200 = vmatprep.subr.mxu0 0.0
        %1201 = vmatpush1.msra.mxu0 0.0
        %1202 = vmatprep.subr.mxu0 0.0
        %1203 = vmatpush1.msra.mxu0 0.0
        %1204 = vmatprep.subr.mxu0 0.0
        %1205 = vmatpush1.msra.mxu0 0.0
        %1206 = vmatprep.subr.mxu0 0.0
        %1207 = vmatpush1.msra.mxu0 0.0
        %1208 = vmatprep.subr.mxu0 0.0
        %1209 = vmatpush1.msra.mxu0 0.0
        %1210 = vmatprep.subr.mxu0 0.0
        %1211 = vmatpush1.msra.mxu0 0.0
        %1212 = vmatprep.subr.mxu0 0.0
        %1213 = vmatpush1.msra.mxu0 0.0
        %1214 = vmatprep.subr.mxu0 0.0
        %1215 = vmatpush1.msra.mxu0 0.0
        %1216 = vmatprep.subr.mxu0 0.0
        %1217 = vmatpush1.msra.mxu0 0.0
        %1218 = vmatprep.subr.mxu0 0.0
        %1219 = vmatpush1.msra.mxu0 0.0
        %1220 = vmatprep.subr.mxu0 0.0
        %1221 = vmatpush1.msra.mxu0 0.0
        %1222 = vmatprep.subr.mxu0 0.0
        %1223 = vmatpush1.msra.mxu0 0.0
        %1224 = vmatprep.mubr.f32.mxu0 0.0
        %1225 = vmatmul.mubr.f32.gmra.mrb[0].mxu0 %v1142
        %v1226 = vpop.f32.mrb[0].mxu0
        %v1227 = vadd.f32 0.0, %v1226
        %v1228 = vpop.f32.mrb[0].mxu0
        %v1229 = vadd.f32 0.0, %v1228
        %1230 = vmatprep.mubr.f32.mxu0 0.0
        %1231 = vmatmul.mubr.f32.gmra.mrb[0].mxu0 %v1144
        %v1232 = vpop.f32.mrb[0].mxu0
        %v1233 = vadd.f32 0.0, %v1232
        %v1234 = vpop.f32.mrb[0].mxu0
        %v1235 = vadd.f32 0.0, %v1234
        %1236 = vmatprep.mubr.f32.mxu0 0.0
        %1237 = vmatmul.mubr.f32.gmra.mrb[0].mxu0 %v1146
        %v1238 = vpop.f32.mrb[0].mxu0
        %v1239 = vadd.f32 0.0, %v1238
        %v1240 = vpop.f32.mrb[0].mxu0
        %v1241 = vadd.f32 0.0, %v1240
        %1242 = vmatprep.mubr.f32.mxu0 0.0
        %1243 = vmatmul.mubr.f32.gmra.mrb[0].mxu0 %v1148
        %v1244 = vpop.f32.mrb[0].mxu0
        %v1245 = vadd.f32 0.0, %v1244
        %v1246 = vpop.f32.mrb[0].mxu0
        %v1247 = vadd.f32 0.0, %v1246
        %1248 = vmatprep.mubr.f32.mxu0 0.0
        %1249 = vmatmul.mubr.f32.gmra.mrb[0].mxu0 %v1150
        %v1250 = vpop.f32.mrb[0].mxu0
        %v1251 = vadd.f32 0.0, %v1250
        %v1252 = vpop.f32.mrb[0].mxu0
        %v1253 = vadd.f32 0.0, %v1252
        %1254 = vmatprep.mubr.f32.mxu0 0.0
        %1255 = vmatmul.mubr.f32.gmra.mrb[0].mxu0 %v1152
        %v1256 = vpop.f32.mrb[0].mxu0
        %v1257 = vadd.f32 0.0, %v1256
        %v1258 = vpop.f32.mrb[0].mxu0
        %v1259 = vadd.f32 0.0, %v1258
        %1260 = vdwg.mxu0
        %v1261 = vld [vmem:[#allocation2] sm:$0xff]
        %v1262 = vld [vmem:[#allocation2 + $0x8] sm:$0xff]
        %v1263 = vld [vmem:[#allocation2 + $0x10] sm:$0xff]
        %v1264 = vld [vmem:[#allocation2 + $0x18] sm:$0xff]
        %v1265 = vld [vmem:[#allocation2 + $0x20] sm:$0xff]
        %v1266 = vld [vmem:[#allocation2 + $0x28] sm:$0xff]
        %v1267 = vld [vmem:[#allocation2 + $0x30] sm:$0xff]
        %v1268 = vld [vmem:[#allocation2 + $0x38] sm:$0xff]
        %v1269 = vld [vmem:[#allocation2 + $0x40] sm:$0xff]
        %v1270 = vld [vmem:[#allocation2 + $0x48] sm:$0xff]
        %v1271 = vld [vmem:[#allocation2 + $0x50] sm:$0xff]
        %v1272 = vld [vmem:[#allocation2 + $0x58] sm:$0xff]
        %v1273 = vadd.f32 %v1261, %v1227
        %v1274 = vadd.f32 %v1262, %v1229
        %v1275 = vadd.f32 %v1263, %v1233
        %v1276 = vadd.f32 %v1264, %v1235
        %v1277 = vadd.f32 %v1265, %v1239
        %v1278 = vadd.f32 %v1266, %v1241
        %v1279 = vadd.f32 %v1267, %v1245
        %v1280 = vadd.f32 %v1268, %v1247
        %v1281 = vadd.f32 %v1269, %v1251
        %v1282 = vadd.f32 %v1270, %v1253
        %v1283 = vadd.f32 %v1271, %v1257
        %v1284 = vadd.f32 %v1272, %v1259
        %1285 = vst [vmem:[#allocation2] sm:$0xff] %v1273
        %1286 = vst [vmem:[#allocation2 + $0x8] sm:$0xff] %v1274
        %1287 = vst [vmem:[#allocation2 + $0x10] sm:$0xff] %v1275
        %1288 = vst [vmem:[#allocation2 + $0x18] sm:$0xff] %v1276
        %1289 = vst [vmem:[#allocation2 + $0x20] sm:$0xff] %v1277
        %1290 = vst [vmem:[#allocation2 + $0x28] sm:$0xff] %v1278
        %1291 = vst [vmem:[#allocation2 + $0x30] sm:$0xff] %v1279
        %1292 = vst [vmem:[#allocation2 + $0x38] sm:$0xff] %v1280
        %1293 = vst [vmem:[#allocation2 + $0x40] sm:$0xff] %v1281
        %1294 = vst [vmem:[#allocation2 + $0x48] sm:$0xff] %v1282
        %1295 = vst [vmem:[#allocation2 + $0x50] sm:$0xff] %v1283
        %1296 = vst [vmem:[#allocation2 + $0x58] sm:$0xff] %v1284
        %1297 = vrot.lane.b32.xlu0 %v157, 96
        %v1298 = vpop.permute.xlu0 %1297
        %1299 = vrot.lane.b32.xlu0 %v195, 96
        %v1300 = vpop.permute.xlu0 %1299
        %1301 = vrot.lane.b32.xlu0 %v158, 96
        %v1302 = vpop.permute.xlu0 %1301
        %vm1303 = vcmask 785408
        %v1304 = vsel %vm1303, %v1298, %v1300
        %v1305 = vsel %vm1303, %v1300, %v1302
        %v1308 = vsel %vm192, %v1304, 0.0
        %v1309 = vsel %vm193, %v1305, 0.0
        %v1310 = vld [vmem:[%s0] sm:$0xff]
        %v1311 = vld [vmem:[%s0 + $0x8] sm:$0xff]
        %v1312 = vld [vmem:[%s0 + $0x10] sm:$0xff]
        %v1313 = vld [vmem:[%s0 + $0x18] sm:$0xff]
        %v1314 = vld [vmem:[%s0 + $0x20] sm:$0xff]
        %v1315 = vld [vmem:[%s0 + $0x28] sm:$0xff]
        %1322 = vrot.lane.b32.xlu0 %v1310, 110
        %v1323 = vpop.permute.xlu0 %1322
        %1324 = vrot.lane.b32.xlu0 %v1311, 110
        %v1325 = vpop.permute.xlu0 %1324
        %1326 = vrot.lane.b32.xlu0 %v1312, 110
        %v1327 = vpop.permute.xlu0 %1326
        %1328 = vrot.lane.b32.xlu0 %v1313, 110
        %v1329 = vpop.permute.xlu0 %1328
        %1330 = vrot.lane.b32.xlu0 %v1314, 110
        %v1331 = vpop.permute.xlu0 %1330
        %1332 = vrot.lane.b32.xlu0 %v1315, 110
        %v1333 = vpop.permute.xlu0 %1332
        %v1334 = vsel %vm205, %v1323, 0
        %v1336 = vsel %vm205, %v1325, 0
        %v1338 = vsel %vm205, %v1327, 0
        %v1340 = vsel %vm205, %v1329, 0
        %v1342 = vsel %vm205, %v1331, 0
        %v1344 = vsel %vm205, %v1333, 0
        %v1347 = vsel %vm224, %v1308, 0
        %v1350 = vsel %vm224, %v1309, 0
        %1352 = vmatprep.subr.mxu0 %v1350
        %1353 = vmatpush1.msra.mxu0 %v1347
        %1354 = vmatprep.subr.mxu0 0.0
        %1355 = vmatpush1.msra.mxu0 0.0
        %1356 = vmatprep.subr.mxu0 0.0
        %1357 = vmatpush1.msra.mxu0 0.0
        %1358 = vmatprep.subr.mxu0 0.0
        %1359 = vmatpush1.msra.mxu0 0.0
        %1360 = vmatprep.subr.mxu0 0.0
        %1361 = vmatpush1.msra.mxu0 0.0
        %1362 = vmatprep.subr.mxu0 0.0
        %1363 = vmatpush1.msra.mxu0 0.0
        %1364 = vmatprep.subr.mxu0 0.0
        %1365 = vmatpush1.msra.mxu0 0.0
        %1366 = vmatprep.subr.mxu0 0.0
        %1367 = vmatpush1.msra.mxu0 0.0
        %1368 = vmatprep.subr.mxu0 0.0
        %1369 = vmatpush1.msra.mxu0 0.0
        %1370 = vmatprep.subr.mxu0 0.0
        %1371 = vmatpush1.msra.mxu0 0.0
        %1372 = vmatprep.subr.mxu0 0.0
        %1373 = vmatpush1.msra.mxu0 0.0
        %1374 = vmatprep.subr.mxu0 0.0
        %1375 = vmatpush1.msra.mxu0 0.0
        %1376 = vmatprep.subr.mxu0 0.0
        %1377 = vmatpush1.msra.mxu0 0.0
        %1378 = vmatprep.subr.mxu0 0.0
        %1379 = vmatpush1.msra.mxu0 0.0
        %1380 = vmatprep.subr.mxu0 0.0
        %1381 = vmatpush1.msra.mxu0 0.0
        %1382 = vmatprep.subr.mxu0 0.0
        %1383 = vmatpush1.msra.mxu0 0.0
        %1384 = vmatprep.subr.mxu0 0.0
        %1385 = vmatpush1.msra.mxu0 0.0
        %1386 = vmatprep.subr.mxu0 0.0
        %1387 = vmatpush1.msra.mxu0 0.0
        %1388 = vmatprep.subr.mxu0 0.0
        %1389 = vmatpush1.msra.mxu0 0.0
        %1390 = vmatprep.subr.mxu0 0.0
        %1391 = vmatpush1.msra.mxu0 0.0
        %1392 = vmatprep.subr.mxu0 0.0
        %1393 = vmatpush1.msra.mxu0 0.0
        %1394 = vmatprep.subr.mxu0 0.0
        %1395 = vmatpush1.msra.mxu0 0.0
        %1396 = vmatprep.subr.mxu0 0.0
        %1397 = vmatpush1.msra.mxu0 0.0
        %1398 = vmatprep.subr.mxu0 0.0
        %1399 = vmatpush1.msra.mxu0 0.0
        %1400 = vmatprep.subr.mxu0 0.0
        %1401 = vmatpush1.msra.mxu0 0.0
        %1402 = vmatprep.subr.mxu0 0.0
        %1403 = vmatpush1.msra.mxu0 0.0
        %1404 = vmatprep.subr.mxu0 0.0
        %1405 = vmatpush1.msra.mxu0 0.0
        %1406 = vmatprep.subr.mxu0 0.0
        %1407 = vmatpush1.msra.mxu0 0.0
        %1408 = vmatprep.subr.mxu0 0.0
        %1409 = vmatpush1.msra.mxu0 0.0
        %1410 = vmatprep.subr.mxu0 0.0
        %1411 = vmatpush1.msra.mxu0 0.0
        %1412 = vmatprep.subr.mxu0 0.0
        %1413 = vmatpush1.msra.mxu0 0.0
        %1414 = vmatprep.subr.mxu0 0.0
        %1415 = vmatpush1.msra.mxu0 0.0
        %1416 = vmatprep.mubr.f32.mxu0 0.0
        %1417 = vmatmul.mubr.f32.gmra.mrb[0].mxu0 %v1334
        %v1418 = vpop.f32.mrb[0].mxu0
        %v1419 = vadd.f32 0.0, %v1418
        %v1420 = vpop.f32.mrb[0].mxu0
        %v1421 = vadd.f32 0.0, %v1420
        %1422 = vmatprep.mubr.f32.mxu0 0.0
        %1423 = vmatmul.mubr.f32.gmra.mrb[0].mxu0 %v1336
        %v1424 = vpop.f32.mrb[0].mxu0
        %v1425 = vadd.f32 0.0, %v1424
        %v1426 = vpop.f32.mrb[0].mxu0
        %v1427 = vadd.f32 0.0, %v1426
        %1428 = vmatprep.mubr.f32.mxu0 0.0
        %1429 = vmatmul.mubr.f32.gmra.mrb[0].mxu0 %v1338
        %v1430 = vpop.f32.mrb[0].mxu0
        %v1431 = vadd.f32 0.0, %v1430
        %v1432 = vpop.f32.mrb[0].mxu0
        %v1433 = vadd.f32 0.0, %v1432
        %1434 = vmatprep.mubr.f32.mxu0 0.0
        %1435 = vmatmul.mubr.f32.gmra.mrb[0].mxu0 %v1340
        %v1436 = vpop.f32.mrb[0].mxu0
        %v1437 = vadd.f32 0.0, %v1436
        %v1438 = vpop.f32.mrb[0].mxu0
        %v1439 = vadd.f32 0.0, %v1438
        %1440 = vmatprep.mubr.f32.mxu0 0.0
        %1441 = vmatmul.mubr.f32.gmra.mrb[0].mxu0 %v1342
        %v1442 = vpop.f32.mrb[0].mxu0
        %v1443 = vadd.f32 0.0, %v1442
        %v1444 = vpop.f32.mrb[0].mxu0
        %v1445 = vadd.f32 0.0, %v1444
        %1446 = vmatprep.mubr.f32.mxu0 0.0
        %1447 = vmatmul.mubr.f32.gmra.mrb[0].mxu0 %v1344
        %v1448 = vpop.f32.mrb[0].mxu0
        %v1449 = vadd.f32 0.0, %v1448
        %v1450 = vpop.f32.mrb[0].mxu0
        %v1451 = vadd.f32 0.0, %v1450
        %1452 = vdwg.mxu0
        %v1453 = vld [vmem:[#allocation2] sm:$0xff]
        %v1454 = vld [vmem:[#allocation2 + $0x8] sm:$0xff]
        %v1455 = vld [vmem:[#allocation2 + $0x10] sm:$0xff]
        %v1456 = vld [vmem:[#allocation2 + $0x18] sm:$0xff]
        %v1457 = vld [vmem:[#allocation2 + $0x20] sm:$0xff]
        %v1458 = vld [vmem:[#allocation2 + $0x28] sm:$0xff]
        %v1459 = vld [vmem:[#allocation2 + $0x30] sm:$0xff]
        %v1460 = vld [vmem:[#allocation2 + $0x38] sm:$0xff]
        %v1461 = vld [vmem:[#allocation2 + $0x40] sm:$0xff]
        %v1462 = vld [vmem:[#allocation2 + $0x48] sm:$0xff]
        %v1463 = vld [vmem:[#allocation2 + $0x50] sm:$0xff]
        %v1464 = vld [vmem:[#allocation2 + $0x58] sm:$0xff]
        %v1465 = vadd.f32 %v1453, %v1419
        %v1466 = vadd.f32 %v1454, %v1421
        %v1467 = vadd.f32 %v1455, %v1425
        %v1468 = vadd.f32 %v1456, %v1427
        %v1469 = vadd.f32 %v1457, %v1431
        %v1470 = vadd.f32 %v1458, %v1433
        %v1471 = vadd.f32 %v1459, %v1437
        %v1472 = vadd.f32 %v1460, %v1439
        %v1473 = vadd.f32 %v1461, %v1443
        %v1474 = vadd.f32 %v1462, %v1445
        %v1475 = vadd.f32 %v1463, %v1449
        %v1476 = vadd.f32 %v1464, %v1451
        %1477 = vst [vmem:[#allocation2] sm:$0xff] %v1465
        %1478 = vst [vmem:[#allocation2 + $0x8] sm:$0xff] %v1466
        %1479 = vst [vmem:[#allocation2 + $0x10] sm:$0xff] %v1467
        %1480 = vst [vmem:[#allocation2 + $0x18] sm:$0xff] %v1468
        %1481 = vst [vmem:[#allocation2 + $0x20] sm:$0xff] %v1469
        %1482 = vst [vmem:[#allocation2 + $0x28] sm:$0xff] %v1470
        %1483 = vst [vmem:[#allocation2 + $0x30] sm:$0xff] %v1471
        %1484 = vst [vmem:[#allocation2 + $0x38] sm:$0xff] %v1472
        %1485 = vst [vmem:[#allocation2 + $0x40] sm:$0xff] %v1473
        %1486 = vst [vmem:[#allocation2 + $0x48] sm:$0xff] %v1474
        %1487 = vst [vmem:[#allocation2 + $0x50] sm:$0xff] %v1475
        %1488 = vst [vmem:[#allocation2 + $0x58] sm:$0xff] %v1476
        %v1489 = vld [vmem:[%s0] sm:$0xff]
        %v1490 = vld [vmem:[%s0 + $0x8] sm:$0xff]
        %v1491 = vld [vmem:[%s0 + $0x10] sm:$0xff]
        %v1492 = vld [vmem:[%s0 + $0x18] sm:$0xff]
        %v1493 = vld [vmem:[%s0 + $0x20] sm:$0xff]
        %v1494 = vld [vmem:[%s0 + $0x28] sm:$0xff]
        %1501 = vrot.lane.b32.xlu0 %v1489, 107
        %v1502 = vpop.permute.xlu0 %1501
        %1503 = vrot.lane.b32.xlu0 %v1490, 107
        %v1504 = vpop.permute.xlu0 %1503
        %1505 = vrot.lane.b32.xlu0 %v1491, 107
        %v1506 = vpop.permute.xlu0 %1505
        %1507 = vrot.lane.b32.xlu0 %v1492, 107
        %v1508 = vpop.permute.xlu0 %1507
        %1509 = vrot.lane.b32.xlu0 %v1493, 107
        %v1510 = vpop.permute.xlu0 %1509
        %1511 = vrot.lane.b32.xlu0 %v1494, 107
        %v1512 = vpop.permute.xlu0 %1511
        %1513 = vrot.lane.b32.xlu0 %v157, 95
        %v1514 = vpop.permute.xlu0 %1513
        %1515 = vrot.lane.b32.xlu0 %v195, 95
        %v1516 = vpop.permute.xlu0 %1515
        %1517 = vrot.lane.b32.xlu0 %v158, 95
        %v1518 = vpop.permute.xlu0 %1517
        %vm1519 = vcmask 777216
        %v1520 = vsel %vm1519, %v1514, %v1516
        %v1521 = vsel %vm1519, %v1516, %v1518
        %v1522 = vsel %vm205, %v1502, 0
        %v1524 = vsel %vm205, %v1504, 0
        %v1526 = vsel %vm205, %v1506, 0
        %v1528 = vsel %vm205, %v1508, 0
        %v1530 = vsel %vm205, %v1510, 0
        %v1532 = vsel %vm205, %v1512, 0
        %v1534 = vsel %vm224, %v1520, 0
        %v1536 = vsel %vm224, %v1521, 0
        %1538 = vmatprep.subr.mxu0 %v1536
        %1539 = vmatpush1.msra.mxu0 %v1534
        %1540 = vmatprep.subr.mxu0 0.0
        %1541 = vmatpush1.msra.mxu0 0.0
        %1542 = vmatprep.subr.mxu0 0.0
        %1543 = vmatpush1.msra.mxu0 0.0
        %1544 = vmatprep.subr.mxu0 0.0
        %1545 = vmatpush1.msra.mxu0 0.0
        %1546 = vmatprep.subr.mxu0 0.0
        %1547 = vmatpush1.msra.mxu0 0.0
        %1548 = vmatprep.subr.mxu0 0.0
        %1549 = vmatpush1.msra.mxu0 0.0
        %1550 = vmatprep.subr.mxu0 0.0
        %1551 = vmatpush1.msra.mxu0 0.0
        %1552 = vmatprep.subr.mxu0 0.0
        %1553 = vmatpush1.msra.mxu0 0.0
        %1554 = vmatprep.subr.mxu0 0.0
        %1555 = vmatpush1.msra.mxu0 0.0
        %1556 = vmatprep.subr.mxu0 0.0
        %1557 = vmatpush1.msra.mxu0 0.0
        %1558 = vmatprep.subr.mxu0 0.0
        %1559 = vmatpush1.msra.mxu0 0.0
        %1560 = vmatprep.subr.mxu0 0.0
        %1561 = vmatpush1.msra.mxu0 0.0
        %1562 = vmatprep.subr.mxu0 0.0
        %1563 = vmatpush1.msra.mxu0 0.0
        %1564 = vmatprep.subr.mxu0 0.0
        %1565 = vmatpush1.msra.mxu0 0.0
        %1566 = vmatprep.subr.mxu0 0.0
        %1567 = vmatpush1.msra.mxu0 0.0
        %1568 = vmatprep.subr.mxu0 0.0
        %1569 = vmatpush1.msra.mxu0 0.0
        %1570 = vmatprep.subr.mxu0 0.0
        %1571 = vmatpush1.msra.mxu0 0.0
        %1572 = vmatprep.subr.mxu0 0.0
        %1573 = vmatpush1.msra.mxu0 0.0
        %1574 = vmatprep.subr.mxu0 0.0
        %1575 = vmatpush1.msra.mxu0 0.0
        %1576 = vmatprep.subr.mxu0 0.0
        %1577 = vmatpush1.msra.mxu0 0.0
        %1578 = vmatprep.subr.mxu0 0.0
        %1579 = vmatpush1.msra.mxu0 0.0
        %1580 = vmatprep.subr.mxu0 0.0
        %1581 = vmatpush1.msra.mxu0 0.0
        %1582 = vmatprep.subr.mxu0 0.0
        %1583 = vmatpush1.msra.mxu0 0.0
        %1584 = vmatprep.subr.mxu0 0.0
        %1585 = vmatpush1.msra.mxu0 0.0
        %1586 = vmatprep.subr.mxu0 0.0
        %1587 = vmatpush1.msra.mxu0 0.0
        %1588 = vmatprep.subr.mxu0 0.0
        %1589 = vmatpush1.msra.mxu0 0.0
        %1590 = vmatprep.subr.mxu0 0.0
        %1591 = vmatpush1.msra.mxu0 0.0
        %1592 = vmatprep.subr.mxu0 0.0
        %1593 = vmatpush1.msra.mxu0 0.0
        %1594 = vmatprep.subr.mxu0 0.0
        %1595 = vmatpush1.msra.mxu0 0.0
        %1596 = vmatprep.subr.mxu0 0.0
        %1597 = vmatpush1.msra.mxu0 0.0
        %1598 = vmatprep.subr.mxu0 0.0
        %1599 = vmatpush1.msra.mxu0 0.0
        %1600 = vmatprep.subr.mxu0 0.0
        %1601 = vmatpush1.msra.mxu0 0.0
        %1602 = vmatprep.mubr.f32.mxu0 0.0
        %1603 = vmatmul.mubr.f32.gmra.mrb[0].mxu0 %v1522
        %v1604 = vpop.f32.mrb[0].mxu0
        %v1605 = vadd.f32 0.0, %v1604
        %v1606 = vpop.f32.mrb[0].mxu0
        %v1607 = vadd.f32 0.0, %v1606
        %1608 = vmatprep.mubr.f32.mxu0 0.0
        %1609 = vmatmul.mubr.f32.gmra.mrb[0].mxu0 %v1524
        %v1610 = vpop.f32.mrb[0].mxu0
        %v1611 = vadd.f32 0.0, %v1610
        %v1612 = vpop.f32.mrb[0].mxu0
        %v1613 = vadd.f32 0.0, %v1612
        %1614 = vmatprep.mubr.f32.mxu0 0.0
        %1615 = vmatmul.mubr.f32.gmra.mrb[0].mxu0 %v1526
        %v1616 = vpop.f32.mrb[0].mxu0
        %v1617 = vadd.f32 0.0, %v1616
        %v1618 = vpop.f32.mrb[0].mxu0
        %v1619 = vadd.f32 0.0, %v1618
        %1620 = vmatprep.mubr.f32.mxu0 0.0
        %1621 = vmatmul.mubr.f32.gmra.mrb[0].mxu0 %v1528
        %v1622 = vpop.f32.mrb[0].mxu0
        %v1623 = vadd.f32 0.0, %v1622
        %v1624 = vpop.f32.mrb[0].mxu0
        %v1625 = vadd.f32 0.0, %v1624
        %1626 = vmatprep.mubr.f32.mxu0 0.0
        %1627 = vmatmul.mubr.f32.gmra.mrb[0].mxu0 %v1530
        %v1628 = vpop.f32.mrb[0].mxu0
        %v1629 = vadd.f32 0.0, %v1628
        %v1630 = vpop.f32.mrb[0].mxu0
        %v1631 = vadd.f32 0.0, %v1630
        %1632 = vmatprep.mubr.f32.mxu0 0.0
        %1633 = vmatmul.mubr.f32.gmra.mrb[0].mxu0 %v1532
        %v1634 = vpop.f32.mrb[0].mxu0
        %v1635 = vadd.f32 0.0, %v1634
        %v1636 = vpop.f32.mrb[0].mxu0
        %v1637 = vadd.f32 0.0, %v1636
        %1638 = vdwg.mxu0
        %v1639 = vld [vmem:[#allocation2] sm:$0xff]
        %v1640 = vld [vmem:[#allocation2 + $0x8] sm:$0xff]
        %v1641 = vld [vmem:[#allocation2 + $0x10] sm:$0xff]
        %v1642 = vld [vmem:[#allocation2 + $0x18] sm:$0xff]
        %v1643 = vld [vmem:[#allocation2 + $0x20] sm:$0xff]
        %v1644 = vld [vmem:[#allocation2 + $0x28] sm:$0xff]
        %v1645 = vld [vmem:[#allocation2 + $0x30] sm:$0xff]
        %v1646 = vld [vmem:[#allocation2 + $0x38] sm:$0xff]
        %v1647 = vld [vmem:[#allocation2 + $0x40] sm:$0xff]
        %v1648 = vld [vmem:[#allocation2 + $0x48] sm:$0xff]
        %v1649 = vld [vmem:[#allocation2 + $0x50] sm:$0xff]
        %v1650 = vld [vmem:[#allocation2 + $0x58] sm:$0xff]
        %v1651 = vadd.f32 %v1639, %v1605
        %v1652 = vadd.f32 %v1640, %v1607
        %v1653 = vadd.f32 %v1641, %v1611
        %v1654 = vadd.f32 %v1642, %v1613
        %v1655 = vadd.f32 %v1643, %v1617
        %v1656 = vadd.f32 %v1644, %v1619
        %v1657 = vadd.f32 %v1645, %v1623
        %v1658 = vadd.f32 %v1646, %v1625
        %v1659 = vadd.f32 %v1647, %v1629
        %v1660 = vadd.f32 %v1648, %v1631
        %v1661 = vadd.f32 %v1649, %v1635
        %v1662 = vadd.f32 %v1650, %v1637
        %1663 = vst [vmem:[#allocation2] sm:$0xff] %v1651
        %1664 = vst [vmem:[#allocation2 + $0x8] sm:$0xff] %v1652
        %1665 = vst [vmem:[#allocation2 + $0x10] sm:$0xff] %v1653
        %1666 = vst [vmem:[#allocation2 + $0x18] sm:$0xff] %v1654
        %1667 = vst [vmem:[#allocation2 + $0x20] sm:$0xff] %v1655
        %1668 = vst [vmem:[#allocation2 + $0x28] sm:$0xff] %v1656
        %1669 = vst [vmem:[#allocation2 + $0x30] sm:$0xff] %v1657
        %1670 = vst [vmem:[#allocation2 + $0x38] sm:$0xff] %v1658
        %1671 = vst [vmem:[#allocation2 + $0x40] sm:$0xff] %v1659
        %1672 = vst [vmem:[#allocation2 + $0x48] sm:$0xff] %v1660
        %1673 = vst [vmem:[#allocation2 + $0x50] sm:$0xff] %v1661
        %1674 = vst [vmem:[#allocation2 + $0x58] sm:$0xff] %v1662
        %1675 = vrot.lane.b32.xlu0 %v157, 94
        %v1676 = vpop.permute.xlu0 %1675
        %1677 = vrot.lane.b32.xlu0 %v195, 94
        %v1678 = vpop.permute.xlu0 %1677
        %1679 = vrot.lane.b32.xlu0 %v158, 94
        %v1680 = vpop.permute.xlu0 %1679
        %vm1681 = vcmask 769024
        %v1682 = vsel %vm1681, %v1676, %v1678
        %v1683 = vsel %vm1681, %v1678, %v1680
        %v1686 = vsel %vm533, %v1682, 0.0
        %v1687 = vsel %vm534, %v1683, 0.0
        %v1688 = vld [vmem:[%s0] sm:$0xff]
        %v1689 = vld [vmem:[%s0 + $0x8] sm:$0xff]
        %v1690 = vld [vmem:[%s0 + $0x10] sm:$0xff]
        %v1691 = vld [vmem:[%s0 + $0x18] sm:$0xff]
        %v1692 = vld [vmem:[%s0 + $0x20] sm:$0xff]
        %v1693 = vld [vmem:[%s0 + $0x28] sm:$0xff]
        %1700 = vrot.lane.b32.xlu0 %v1688, 104
        %v1701 = vpop.permute.xlu0 %1700
        %1702 = vrot.lane.b32.xlu0 %v1689, 104
        %v1703 = vpop.permute.xlu0 %1702
        %1704 = vrot.lane.b32.xlu0 %v1690, 104
        %v1705 = vpop.permute.xlu0 %1704
        %1706 = vrot.lane.b32.xlu0 %v1691, 104
        %v1707 = vpop.permute.xlu0 %1706
        %1708 = vrot.lane.b32.xlu0 %v1692, 104
        %v1709 = vpop.permute.xlu0 %1708
        %1710 = vrot.lane.b32.xlu0 %v1693, 104
        %v1711 = vpop.permute.xlu0 %1710
        %v1712 = vsel %vm205, %v1701, 0
        %v1714 = vsel %vm205, %v1703, 0
        %v1716 = vsel %vm205, %v1705, 0
        %v1718 = vsel %vm205, %v1707, 0
        %v1720 = vsel %vm205, %v1709, 0
        %v1722 = vsel %vm205, %v1711, 0
        %v1725 = vsel %vm224, %v1686, 0
        %v1728 = vsel %vm224, %v1687, 0
        %1730 = vmatprep.subr.mxu0 %v1728
        %1731 = vmatpush1.msra.mxu0 %v1725
        %1732 = vmatprep.subr.mxu0 0.0
        %1733 = vmatpush1.msra.mxu0 0.0
        %1734 = vmatprep.subr.mxu0 0.0
        %1735 = vmatpush1.msra.mxu0 0.0
        %1736 = vmatprep.subr.mxu0 0.0
        %1737 = vmatpush1.msra.mxu0 0.0
        %1738 = vmatprep.subr.mxu0 0.0
        %1739 = vmatpush1.msra.mxu0 0.0
        %1740 = vmatprep.subr.mxu0 0.0
        %1741 = vmatpush1.msra.mxu0 0.0
        %1742 = vmatprep.subr.mxu0 0.0
        %1743 = vmatpush1.msra.mxu0 0.0
        %1744 = vmatprep.subr.mxu0 0.0
        %1745 = vmatpush1.msra.mxu0 0.0
        %1746 = vmatprep.subr.mxu0 0.0
        %1747 = vmatpush1.msra.mxu0 0.0
        %1748 = vmatprep.subr.mxu0 0.0
        %1749 = vmatpush1.msra.mxu0 0.0
        %1750 = vmatprep.subr.mxu0 0.0
        %1751 = vmatpush1.msra.mxu0 0.0
        %1752 = vmatprep.subr.mxu0 0.0
        %1753 = vmatpush1.msra.mxu0 0.0
        %1754 = vmatprep.subr.mxu0 0.0
        %1755 = vmatpush1.msra.mxu0 0.0
        %1756 = vmatprep.subr.mxu0 0.0
        %1757 = vmatpush1.msra.mxu0 0.0
        %1758 = vmatprep.subr.mxu0 0.0
        %1759 = vmatpush1.msra.mxu0 0.0
        %1760 = vmatprep.subr.mxu0 0.0
        %1761 = vmatpush1.msra.mxu0 0.0
        %1762 = vmatprep.subr.mxu0 0.0
        %1763 = vmatpush1.msra.mxu0 0.0
        %1764 = vmatprep.subr.mxu0 0.0
        %1765 = vmatpush1.msra.mxu0 0.0
        %1766 = vmatprep.subr.mxu0 0.0
        %1767 = vmatpush1.msra.mxu0 0.0
        %1768 = vmatprep.subr.mxu0 0.0
        %1769 = vmatpush1.msra.mxu0 0.0
        %1770 = vmatprep.subr.mxu0 0.0
        %1771 = vmatpush1.msra.mxu0 0.0
        %1772 = vmatprep.subr.mxu0 0.0
        %1773 = vmatpush1.msra.mxu0 0.0
        %1774 = vmatprep.subr.mxu0 0.0
        %1775 = vmatpush1.msra.mxu0 0.0
        %1776 = vmatprep.subr.mxu0 0.0
        %1777 = vmatpush1.msra.mxu0 0.0
        %1778 = vmatprep.subr.mxu0 0.0
        %1779 = vmatpush1.msra.mxu0 0.0
        %1780 = vmatprep.subr.mxu0 0.0
        %1781 = vmatpush1.msra.mxu0 0.0
        %1782 = vmatprep.subr.mxu0 0.0
        %1783 = vmatpush1.msra.mxu0 0.0
        %1784 = vmatprep.subr.mxu0 0.0
        %1785 = vmatpush1.msra.mxu0 0.0
        %1786 = vmatprep.subr.mxu0 0.0
        %1787 = vmatpush1.msra.mxu0 0.0
        %1788 = vmatprep.subr.mxu0 0.0
        %1789 = vmatpush1.msra.mxu0 0.0
        %1790 = vmatprep.subr.mxu0 0.0
        %1791 = vmatpush1.msra.mxu0 0.0
        %1792 = vmatprep.subr.mxu0 0.0
        %1793 = vmatpush1.msra.mxu0 0.0
        %1794 = vmatprep.mubr.f32.mxu0 0.0
        %1795 = vmatmul.mubr.f32.gmra.mrb[0].mxu0 %v1712
        %v1796 = vpop.f32.mrb[0].mxu0
        %v1797 = vadd.f32 0.0, %v1796
        %v1798 = vpop.f32.mrb[0].mxu0
        %v1799 = vadd.f32 0.0, %v1798
        %1800 = vmatprep.mubr.f32.mxu0 0.0
        %1801 = vmatmul.mubr.f32.gmra.mrb[0].mxu0 %v1714
        %v1802 = vpop.f32.mrb[0].mxu0
        %v1803 = vadd.f32 0.0, %v1802
        %v1804 = vpop.f32.mrb[0].mxu0
        %v1805 = vadd.f32 0.0, %v1804
        %1806 = vmatprep.mubr.f32.mxu0 0.0
        %1807 = vmatmul.mubr.f32.gmra.mrb[0].mxu0 %v1716
        %v1808 = vpop.f32.mrb[0].mxu0
        %v1809 = vadd.f32 0.0, %v1808
        %v1810 = vpop.f32.mrb[0].mxu0
        %v1811 = vadd.f32 0.0, %v1810
        %1812 = vmatprep.mubr.f32.mxu0 0.0
        %1813 = vmatmul.mubr.f32.gmra.mrb[0].mxu0 %v1718
        %v1814 = vpop.f32.mrb[0].mxu0
        %v1815 = vadd.f32 0.0, %v1814
        %v1816 = vpop.f32.mrb[0].mxu0
        %v1817 = vadd.f32 0.0, %v1816
        %1818 = vmatprep.mubr.f32.mxu0 0.0
        %1819 = vmatmul.mubr.f32.gmra.mrb[0].mxu0 %v1720
        %v1820 = vpop.f32.mrb[0].mxu0
        %v1821 = vadd.f32 0.0, %v1820
        %v1822 = vpop.f32.mrb[0].mxu0
        %v1823 = vadd.f32 0.0, %v1822
        %1824 = vmatprep.mubr.f32.mxu0 0.0
        %1825 = vmatmul.mubr.f32.gmra.mrb[0].mxu0 %v1722
        %v1826 = vpop.f32.mrb[0].mxu0
        %v1827 = vadd.f32 0.0, %v1826
        %v1828 = vpop.f32.mrb[0].mxu0
        %v1829 = vadd.f32 0.0, %v1828
        %1830 = vdwg.mxu0
        %v1831 = vld [vmem:[#allocation2] sm:$0xff]
        %v1832 = vld [vmem:[#allocation2 + $0x8] sm:$0xff]
        %v1833 = vld [vmem:[#allocation2 + $0x10] sm:$0xff]
        %v1834 = vld [vmem:[#allocation2 + $0x18] sm:$0xff]
        %v1835 = vld [vmem:[#allocation2 + $0x20] sm:$0xff]
        %v1836 = vld [vmem:[#allocation2 + $0x28] sm:$0xff]
        %v1837 = vld [vmem:[#allocation2 + $0x30] sm:$0xff]
        %v1838 = vld [vmem:[#allocation2 + $0x38] sm:$0xff]
        %v1839 = vld [vmem:[#allocation2 + $0x40] sm:$0xff]
        %v1840 = vld [vmem:[#allocation2 + $0x48] sm:$0xff]
        %v1841 = vld [vmem:[#allocation2 + $0x50] sm:$0xff]
        %v1842 = vld [vmem:[#allocation2 + $0x58] sm:$0xff]
        %v1843 = vadd.f32 %v1831, %v1797
        %v1844 = vadd.f32 %v1832, %v1799
        %v1845 = vadd.f32 %v1833, %v1803
        %v1846 = vadd.f32 %v1834, %v1805
        %v1847 = vadd.f32 %v1835, %v1809
        %v1848 = vadd.f32 %v1836, %v1811
        %v1849 = vadd.f32 %v1837, %v1815
        %v1850 = vadd.f32 %v1838, %v1817
        %v1851 = vadd.f32 %v1839, %v1821
        %v1852 = vadd.f32 %v1840, %v1823
        %v1853 = vadd.f32 %v1841, %v1827
        %v1854 = vadd.f32 %v1842, %v1829
        %1855 = vst [vmem:[#allocation2] sm:$0xff] %v1843
        %1856 = vst [vmem:[#allocation2 + $0x8] sm:$0xff] %v1844
        %1857 = vst [vmem:[#allocation2 + $0x10] sm:$0xff] %v1845
        %1858 = vst [vmem:[#allocation2 + $0x18] sm:$0xff] %v1846
        %1859 = vst [vmem:[#allocation2 + $0x20] sm:$0xff] %v1847
        %1860 = vst [vmem:[#allocation2 + $0x28] sm:$0xff] %v1848
        %1861 = vst [vmem:[#allocation2 + $0x30] sm:$0xff] %v1849
        %1862 = vst [vmem:[#allocation2 + $0x38] sm:$0xff] %v1850
        %1863 = vst [vmem:[#allocation2 + $0x40] sm:$0xff] %v1851
        %1864 = vst [vmem:[#allocation2 + $0x48] sm:$0xff] %v1852
        %1865 = vst [vmem:[#allocation2 + $0x50] sm:$0xff] %v1853
        %1866 = vst [vmem:[#allocation2 + $0x58] sm:$0xff] %v1854
        %v1867 = vld [vmem:[#allocation2] sm:$0xff]
        %v1868 = vld [vmem:[#allocation2 + $0x8] sm:$0xff]
        %v1869 = vld [vmem:[#allocation2 + $0x10] sm:$0xff]
        %v1870 = vld [vmem:[#allocation2 + $0x18] sm:$0xff]
        %v1871 = vld [vmem:[#allocation2 + $0x20] sm:$0xff]
        %v1872 = vld [vmem:[#allocation2 + $0x28] sm:$0xff]
        %v1873 = vld [vmem:[#allocation2 + $0x30] sm:$0xff]
        %v1874 = vld [vmem:[#allocation2 + $0x38] sm:$0xff]
        %v1875 = vld [vmem:[#allocation2 + $0x40] sm:$0xff]
        %v1876 = vld [vmem:[#allocation2 + $0x48] sm:$0xff]
        %v1877 = vld [vmem:[#allocation2 + $0x50] sm:$0xff]
        %v1878 = vld [vmem:[#allocation2 + $0x58] sm:$0xff]
        %1879 = vst [vmem:[%s150] sm:$0xff] %v1867
        %1880 = vst [vmem:[%s150 + $0x8] sm:$0xff] %v1868
        %1881 = vst [vmem:[%s150 + $0x10] sm:$0xff] %v1869
        %1882 = vst [vmem:[%s150 + $0x18] sm:$0xff] %v1870
        %1883 = vst [vmem:[%s150 + $0x20] sm:$0xff] %v1871
        %1884 = vst [vmem:[%s150 + $0x28] sm:$0xff] %v1872
        %1885 = vst [vmem:[%s150 + $0x30] sm:$0xff] %v1873
        %1886 = vst [vmem:[%s150 + $0x38] sm:$0xff] %v1874
        %1887 = vst [vmem:[%s150 + $0x40] sm:$0xff] %v1875
        %1888 = vst [vmem:[%s150 + $0x48] sm:$0xff] %v1876
        %1889 = vst [vmem:[%s150 + $0x50] sm:$0xff] %v1877
        %1890 = vst [vmem:[%s150 + $0x58] sm:$0xff] %v1878
        %s1891 = sand.u32 %s85, 1
        %s1892 = scalar_lea.sflag [#allocation4], %s1891
        %s1893 = sand.u32 %s85, 1
        %s1894 = smul.addr %s1893, 96
        %s1895 = scalar_lea.vmem [#allocation3], %s1894
        // Predicated region
        $region29: #{tpu_custom_call.1} parent=27 // pred_check
          %p1896 = pneg %p95
        $region30: #{tpu_custom_call.1} parent=27 // pred_check_branch
          %1898 = sbr.rel (%p1896) target = $region32
        $region31: #{tpu_custom_call.1} parent=27 // pred_region
          %s1899 = smul.u32 2, %s21
          %s1901 = ssub.s32 1536, 1536
          %1902 = vsyncadd %s1892, %s1901
          %s1903 = smul.addr %s20, 12
          %s1904 = sadd.s32 %s1899, %s1903
          %s1905 = smul.addr %s1904, 128
          %s1906 = scalar_lea.hbm %s2, %s1905
          %s1907 = sshll.u32 %s1895, 4
          %s1908 = int_to_ptr.vmem [resolvable:$true] %s1907
          %1913 = dma.vmem_to_hbm [thread:$0]  %s1908, 1536, %s1906, %s1892, 256, 256, 16
        $region32: #{tpu_custom_call.1} parent=27 // pred_fallthru
          _
      $region28: #{tpu_custom_call.1} parent=5 // pred_fallthru
        _
      %p1914 = scmp.le.s32.totalorder 2, %s11
      // Predicated region
      $region33: #{tpu_custom_call.1} parent=5 // pred_check
        %p1915 = pneg %p1914
      $region34: #{tpu_custom_call.1} parent=5 // pred_check_branch
        %1917 = sbr.rel (%p1915) target = $region36
      $region35: #{tpu_custom_call.1} parent=5 // pred_region
        %s1918 = ssub.s32 %s11, 2
        // Predicated region
        $region37: #{tpu_custom_call.1} parent=35 // pred_check
          %p1919 = pneg %p101
        $region38: #{tpu_custom_call.1} parent=35 // pred_check_branch
          %1921 = sbr.rel (%p1919) target = $region40
        $region39: #{tpu_custom_call.1} parent=35 // pred_region
          %s1922 = sand.u32 %s86, 1
          %s1923 = scalar_lea.sflag [#allocation4], %s1922
          %s1924 = sand.u32 %s86, 1
          %s1925 = smul.addr %s1924, 96
          %s1926 = scalar_lea.vmem [#allocation3], %s1925
          %1927 = dma.done %s1923, 1536
        $region40: #{tpu_custom_call.1} parent=35 // pred_fallthru
          _
      $region36: #{tpu_custom_call.1} parent=5 // pred_fallthru
        _
    $region6: #{tpu_custom_call.1} parent=1 // loop_footer
      %s15 = sadd.s32 1, %s11
    $region7: #{tpu_custom_call.1} parent=1 // loop_footer_branch
      %10 = sbr.rel target = $region3
    $region8: #{tpu_custom_call.1} parent=1 // loop_exit
      _
    %1928 = vsyncpa [#allocation4], 1
    %s1929 = scalar_lea.sflag [#allocation4], 1
    %1930 = vsyncpa %s1929, 1

</llo_original>
